<compile_context>
chip_gen: v6e
topology: v6e:2x2x1
jax: 0.10.0
libtpu: 0.0.40
codegen_flags: <defaults>
</compile_context>

<pallas_src>
import math
import jax
import jax.numpy as jnp
from jax.experimental import pallas as pl
from jax.experimental.pallas import tpu as pltpu

LANE = 128     # lane width (last dim of a vreg)
SUBLANE = 8    # f32 sublane count

# Cached: does this Pallas build accept pipeline_mode=pl.Buffered(1) on the
# main pallas_call pipeline?  (None = unknown, True/False after first call.)
_PARAM_BUFFERED_OK = None


def _round_up(n, m):
    return ((n + m - 1) // m) * m


def make_ff_kernel(num_layers: int, activation: str = "relu"):
    """Fused MLP kernel for a fixed number of hidden layers."""
    act = {"relu": lambda a: jnp.maximum(a, 0.0), "tanh": jnp.tanh}[activation]

    def kernel(*refs):
        # refs = (x, W0, b0, ..., W_{L-1}, b_{L-1}, W_out, b_out, out)
        x_ref, out_ref = refs[0], refs[-1]
        params = refs[1:-1]
        cdtype = params[0].dtype  # MXU operand dtype = weight dtype

        h = x_ref[...]
        if h.dtype != cdtype:
            h = h.astype(cdtype)

        for l in range(num_layers):
            w = params[2 * l][...]
            b = params[2 * l + 1][...]            # f32 bias, no cast needed
            acc = jnp.dot(h, w, preferred_element_type=jnp.float32)
            acc = acc + b                         # f32 epilogue (v5e: no bf16 VPU)
            h = act(acc).astype(cdtype)           # activation, back to MXU dtype

        w_out = params[2 * num_layers][...]
        b_out = params[2 * num_layers + 1][...]
        y = jnp.dot(h, w_out, preferred_element_type=jnp.float32)
        y = y + b_out
        out_ref[...] = y.astype(out_ref.dtype)

    return kernel


def _pad_params(dim_input, hidden_params, out_params, pad_output, lane_multiple):
    """Zero-pad feature dims to multiples of `lane_multiple` lanes (exact).

    Hidden layers are always padded (intermediate-only, no HBM cost).  The
    output layer is padded only when `pad_output` is True.
    """
    padded_hidden = []
    prev_orig, prev_pad = dim_input, dim_input   # x itself is not padded
    for w, b in hidden_params:
        d_out = w.shape[1]
        d_out_pad = _round_up(d_out, lane_multiple)
        w_p = jnp.zeros((prev_pad, d_out_pad), w.dtype).at[:prev_orig, :d_out].set(w)
        b_p = jnp.zeros((1, d_out_pad), b.dtype).at[:, :d_out].set(b)
        padded_hidden.append((w_p, b_p))
        prev_orig, prev_pad = d_out, d_out_pad
    w, b = out_params
    d_out = w.shape[1]
    d_out_pad = _round_up(d_out, lane_multiple) if pad_output else d_out
    w_p = jnp.zeros((prev_pad, d_out_pad), w.dtype).at[:prev_orig, :d_out].set(w)
    b_p = jnp.zeros((1, d_out_pad), b.dtype).at[:, :d_out].set(b)
    return padded_hidden, (w_p, b_p), d_out_pad


def _choose_batch_tiling(B, min_steps=4, max_tile=2048):
    """Pick (batch_tile, padded_B).

    Largest tile <= max_tile that is a multiple of 8 and leaves >= min_steps
    grid steps (>= 2 steps per v7x TensorCore).  Prefers exact divisors of B;
    otherwise B is zero-padded up to a multiple of the tile (padded rows are
    discarded by the caller)."""
    upper = min(max_tile,
                _round_up(max(B // max(min_steps, 1), SUBLANE), SUBLANE))
    for t in range(upper, SUBLANE - 1, -SUBLANE):
        if B % t == 0:
            return t, B
    t = upper
    return t, _round_up(B, t)


def ff_forward(x, hidden_params, out_params, *,
               activation="relu",
               dropout_rate=0.0,
               training=False,
               layer_norm=False,
               residual_connection=False,
               param_dtype=jnp.bfloat16,
               batch_tile=None,
               min_grid_steps=4,
               max_batch_tile=2048,
               lane_multiple=LANE,
               pad_output=None):
    """Fused FF forward pass via a single pallas_call.

    x             : [B, dim_input]
    hidden_params : list of (W[in,out], b[1,out]) per hidden layer
    out_params    : (W_out[in,out], b_out[1,out])
    param_dtype   : MXU weight-operand dtype (default bf16; accumulation is f32
                    either way).  Pass jnp.float32 for exact-precision math.
    lane_multiple : feature-dim padding granularity (128; consider 256 on
                    v6e/v7x compute-bound configs to fill the 2x256^2 MXU).
    """
    if activation not in ("relu", "tanh"):
        raise NotImplementedError(f"activation={activation!r} not supported")
    if layer_norm:
        # TODO(synk): layer_norm needs an unpadded (or masked) mean/var path.
        raise NotImplementedError("layer_norm=True is not implemented")
    if residual_connection:
        # TODO(synk): residual connection across lane-padded activations.
        raise NotImplementedError("residual_connection=True is not implemented")
    if dropout_rate and training:
        # TODO(synk): training-mode dropout (pltpu.prng_* mask) not implemented.
        raise NotImplementedError("dropout in training mode is not implemented")

    B, dim_input = x.shape
    num_layers = len(hidden_params)
    dim_output = out_params[0].shape[1]

    # Weights in the MXU operand dtype; biases forced to f32 (f32 epilogue).
    if param_dtype is not None:
        hidden_params = [(w.astype(param_dtype), b) for w, b in hidden_params]
        out_params = (out_params[0].astype(param_dtype), out_params[1])
    hidden_params = [(w, b.astype(jnp.float32)) for w, b in hidden_params]
    out_params = (out_params[0], out_params[1].astype(jnp.float32))

    if pad_output is None:
        # Lane-padding a tiny output (e.g. 16) writes up to 8x the output
        # bytes and then pays an XLA slice; only pad when >= one full lane.
        pad_output = dim_output >= lane_multiple
    hidden_params, out_params, out_cols = _pad_params(
        dim_input, hidden_params, out_params, pad_output, lane_multiple)

    flat_params = []
    for w, b in hidden_params:
        flat_params += [w, b]
    flat_params += [out_params[0], out_params[1]]

    # ---- batch tiling --------------------------------------------------------
    if batch_tile is None:
        batch_tile, B_pad = _choose_batch_tiling(B, min_grid_steps, max_batch_tile)
    else:
        assert batch_tile % SUBLANE == 0 or batch_tile == B, (
            "batch_tile must be a multiple of 8 (f32 sublane) or equal to B")
        B_pad = _round_up(B, batch_tile)

    # ---- VMEM limit + residency guard ----------------------------------------
    try:
        vmem_limit = int(pltpu.get_tpu_info().vmem_capacity_bytes * 0.85)
    except Exception:
        vmem_limit = 48 * 1024 * 1024

    param_bytes = sum(int(p.size) * p.dtype.itemsize for p in flat_params)
    if param_bytes > vmem_limit:
        # TODO(synk): stream weights (second grid axis over layers or
        # pltpu.emit_pipeline over K) when the stack does not fit VMEM.
        raise NotImplementedError(
            f"resident parameter stack ({param_bytes} B) exceeds the VMEM "
            f"limit ({vmem_limit} B); weight streaming not implemented")

    widest = max([dim_input, out_cols] + [w.shape[1] for w in flat_params[0::2]])

    def _step_bytes(tile):
        x_b = 2 * tile * dim_input * x.dtype.itemsize   # double-buffered x
        o_b = 2 * tile * out_cols * x.dtype.itemsize    # double-buffered out
        act_b = 3 * tile * widest * 4                   # f32 acc + casts (rough)
        return x_b + o_b + act_b

    while (param_bytes + _step_bytes(batch_tile) > vmem_limit
           and batch_tile > SUBLANE):
        batch_tile = max(SUBLANE, _round_up(batch_tile // 2, SUBLANE))
        B_pad = _round_up(B, batch_tile)

    grid = (B_pad // batch_tile,)

    # ---- zero-pad awkward batch sizes (padded rows discarded afterwards) -----
    if B_pad != B:
        x_in = jnp.zeros((B_pad, dim_input), x.dtype).at[:B].set(x)
    else:
        x_in = x

    # ---- advisory cost estimate ----------------------------------------------
    flops = 0
    for w in flat_params[0::2]:
        flops += 2 * B_pad * w.shape[0] * w.shape[1]
    transcendentals = 0
    if activation == "tanh":
        transcendentals = B_pad * sum(w.shape[1] for w, _ in hidden_params)
    bytes_accessed = (int(x_in.size) * x_in.dtype.itemsize
                      + B_pad * out_cols * x.dtype.itemsize
                      + param_bytes)
    cost = pl.CostEstimate(flops=int(flops), transcendentals=int(transcendentals),
                           bytes_accessed=int(bytes_accessed))

    kernel = make_ff_kernel(num_layers, activation)

    def _call(use_buffered):
        in_specs = [pl.BlockSpec((batch_tile, dim_input), lambda i: (i, 0))]
        for p in flat_params:
            # Parameter blocks never change index across the grid: single
            # buffer them (the default second buffer is pure VMEM waste).
            if use_buffered:
                in_specs.append(pl.BlockSpec(p.shape, lambda i: (0, 0),
                                             pipeline_mode=pl.Buffered(1)))
            else:
                in_specs.append(pl.BlockSpec(p.shape, lambda i: (0, 0)))
        out_spec = pl.BlockSpec((batch_tile, out_cols), lambda i: (i, 0))
        return pl.pallas_call(
            kernel,
            out_shape=jax.ShapeDtypeStruct((B_pad, out_cols), x.dtype),
            grid_spec=pltpu.PrefetchScalarGridSpec(
                num_scalar_prefetch=0,
                grid=grid,
                in_specs=in_specs,
                out_specs=out_spec,
            ),
            compiler_params=pltpu.CompilerParams(
                dimension_semantics=("parallel",),
                vmem_limit_bytes=vmem_limit,
            ),
            cost_estimate=cost,
        )(x_in, *flat_params)

    global _PARAM_BUFFERED_OK
    if _PARAM_BUFFERED_OK is False:
        out_full = _call(False)
    else:
        try:
            out_full = _call(True)
            _PARAM_BUFFERED_OK = True
        except Exception:
            if _PARAM_BUFFERED_OK:     # Buffered(1) known-good -> real error
                raise
            # Fallback for Pallas builds where per-operand pipeline_mode is not
            # accepted on the main pallas_call pipeline (default 2-buffering).
            _PARAM_BUFFERED_OK = False
            out_full = _call(False)

    out = out_full
    if B_pad != B:
        out = out[:B]
    if out_cols != dim_output:
        out = out[:, :dim_output]
    return out


def init_linear(key, fan_in, fan_out):
    """Deterministic init mimicking torch.nn.Linear default (uniform +-1/sqrt(fan_in))."""
    kw, kb = jax.random.split(key)
    bound = 1.0 / math.sqrt(fan_in)
    w = jax.random.uniform(kw, (fan_in, fan_out), jnp.float32, -bound, bound)
    b = jax.random.uniform(kb, (1, fan_out), jnp.float32, -bound, bound)
    return w, b


def ff_reference(x, hidden_params, out_params, activation="relu"):
    act = {"relu": lambda a: jnp.maximum(a, 0.0), "tanh": jnp.tanh}[activation]
    h = x
    for w, b in hidden_params:
        h = act(h @ w + b)
    w_out, b_out = out_params
    return h @ w_out + b_out


if __name__ == "__main__":
    # FF(dim_input=32, dim_hidden=64, dim_output=16, num_layers=2), small batch.
    dim_input, dim_hidden, dim_output, num_layers = 32, 64, 16, 2
    batch = 64

    key = jax.random.PRNGKey(0)
    keys = jax.random.split(key, num_layers + 2)

    hidden_params = []
    d_in = dim_input
    for l in range(num_layers):
        hidden_params.append(init_linear(keys[l], d_in, dim_hidden))
        d_in = dim_hidden
    out_params = init_linear(keys[num_layers], d_in, dim_output)

    x = jax.random.normal(keys[num_layers + 1], (batch, dim_input), jnp.float32)
    y_ref = ff_reference(x, hidden_params, out_params)

    # 1) Exact-precision path (f32 weights) -> tight tolerance.  grid=(4,).
    y32 = jax.block_until_ready(
        ff_forward(x, hidden_params, out_params, param_dtype=jnp.float32))
    assert y32.shape == (batch, dim_output)
    assert jnp.allclose(y32, y_ref, atol=1e-5, rtol=1e-5), "f32 mismatch vs reference"

    # 2) Default bf16-weight path (f32 accumulation) -> bf16-level tolerance.
    ybf = jax.block_until_ready(ff_forward(x, hidden_params, out_params))
    assert jnp.allclose(ybf, y_ref, atol=5e-2, rtol=5e-2), "bf16 mismatch vs reference"

    # 3) Awkward batch size (52 -> zero-padded to 64 rows, then sliced back).
    xr = jax.random.normal(jax.random.PRNGKey(1), (52, dim_input), jnp.float32)
    yr = jax.block_until_ready(
        ff_forward(xr, hidden_params, out_params, param_dtype=jnp.float32))
    yr_ref = ff_reference(xr, hidden_params, out_params)
    assert yr.shape == (52, dim_output)
    assert jnp.allclose(yr, yr_ref, atol=1e-5, rtol=1e-5), "ragged-batch mismatch"

    # 4) tanh activation path (f32 weights).
    yt = jax.block_until_ready(
        ff_forward(x, hidden_params, out_params, activation="tanh",
                   param_dtype=jnp.float32))
    yt_ref = ff_reference(x, hidden_params, out_params, activation="tanh")
    assert jnp.allclose(yt, yt_ref, atol=2e-3, rtol=2e-3), "tanh mismatch vs reference"

    print("KERNEL_OK")
</pallas_src>

<mosaic_0001>
module attributes {stable_mosaic.version = 11 : i64} {
  func.func @kernel(%arg0: i32, %arg1: memref<16x32xf32, #tpu.memory_space<vmem>>, %arg2: memref<32x128xf32, #tpu.memory_space<vmem>>, %arg3: memref<1x128xf32, #tpu.memory_space<vmem>>, %arg4: memref<128x128xf32, #tpu.memory_space<vmem>>, %arg5: memref<1x128xf32, #tpu.memory_space<vmem>>, %arg6: memref<128x16xf32, #tpu.memory_space<vmem>>, %arg7: memref<1x16xf32, #tpu.memory_space<vmem>>, %arg8: memref<16x16xf32, #tpu.memory_space<vmem>>) attributes {dimension_semantics = [#tpu.dimension_semantics<parallel>], iteration_bounds = array<i64: 4>, scalar_prefetch = 0 : i64, scratch_operands = 0 : i64, tpu.core_type = #tpu.core_type<tc>, window_params = [{transform_indices = @transform_0, window_bounds = array<i64: 16, 32>}, {pipeline_mode = #tpu.pipeline_mode<synchronous>, transform_indices = @transform_1, window_bounds = array<i64: 32, 128>}, {pipeline_mode = #tpu.pipeline_mode<synchronous>, transform_indices = @transform_2, window_bounds = array<i64: 1, 128>}, {pipeline_mode = #tpu.pipeline_mode<synchronous>, transform_indices = @transform_3, window_bounds = array<i64: 128, 128>}, {pipeline_mode = #tpu.pipeline_mode<synchronous>, transform_indices = @transform_4, window_bounds = array<i64: 1, 128>}, {pipeline_mode = #tpu.pipeline_mode<synchronous>, transform_indices = @transform_5, window_bounds = array<i64: 128, 16>}, {pipeline_mode = #tpu.pipeline_mode<synchronous>, transform_indices = @transform_6, window_bounds = array<i64: 1, 16>}, {transform_indices = @transform_7, window_bounds = array<i64: 16, 16>}]} {
    %c0 = arith.constant 0 : index
    %c0_0 = arith.constant 0 : index
    %0 = vector.load %arg1[%c0, %c0_0] : memref<16x32xf32, #tpu.memory_space<vmem>>, vector<16x32xf32>
    %c0_1 = arith.constant 0 : index
    %c0_2 = arith.constant 0 : index
    %1 = vector.load %arg2[%c0_1, %c0_2] : memref<32x128xf32, #tpu.memory_space<vmem>>, vector<32x128xf32>
    %c0_3 = arith.constant 0 : index
    %c0_4 = arith.constant 0 : index
    %2 = vector.load %arg3[%c0_3, %c0_4] : memref<1x128xf32, #tpu.memory_space<vmem>>, vector<1x128xf32>
    %cst = arith.constant dense<0.000000e+00> : vector<16x128xf32>
    %3 = tpu.matmul %0, %1, %cst {dimension_numbers = #tpu.dot_dimension_numbers<[1], [0], [0], [1], [0, 0, 1, 1], [], []>} : vector<16x32xf32>, vector<32x128xf32>, vector<16x128xf32> -> vector<16x128xf32>
    %4 = vector.broadcast %2 : vector<1x128xf32> to vector<16x128xf32>
    %5 = arith.addf %3, %4 : vector<16x128xf32>
    %cst_5 = arith.constant 0.000000e+00 : f32
    %6 = vector.broadcast %cst_5 : f32 to vector<16x128xf32>
    %7 = arith.maximumf %5, %6 : vector<16x128xf32>
    %c0_6 = arith.constant 0 : index
    %c0_7 = arith.constant 0 : index
    %8 = vector.load %arg4[%c0_6, %c0_7] : memref<128x128xf32, #tpu.memory_space<vmem>>, vector<128x128xf32>
    %c0_8 = arith.constant 0 : index
    %c0_9 = arith.constant 0 : index
    %9 = vector.load %arg5[%c0_8, %c0_9] : memref<1x128xf32, #tpu.memory_space<vmem>>, vector<1x128xf32>
    %cst_10 = arith.constant dense<0.000000e+00> : vector<16x128xf32>
    %10 = tpu.matmul %7, %8, %cst_10 {dimension_numbers = #tpu.dot_dimension_numbers<[1], [0], [0], [1], [0, 0, 1, 1], [], []>} : vector<16x128xf32>, vector<128x128xf32>, vector<16x128xf32> -> vector<16x128xf32>
    %11 = vector.broadcast %9 : vector<1x128xf32> to vector<16x128xf32>
    %12 = arith.addf %10, %11 : vector<16x128xf32>
    %cst_11 = arith.constant 0.000000e+00 : f32
    %13 = vector.broadcast %cst_11 : f32 to vector<16x128xf32>
    %14 = arith.maximumf %12, %13 : vector<16x128xf32>
    %c0_12 = arith.constant 0 : index
    %c0_13 = arith.constant 0 : index
    %15 = vector.load %arg6[%c0_12, %c0_13] : memref<128x16xf32, #tpu.memory_space<vmem>>, vector<128x16xf32>
    %c0_14 = arith.constant 0 : index
    %c0_15 = arith.constant 0 : index
    %16 = vector.load %arg7[%c0_14, %c0_15] : memref<1x16xf32, #tpu.memory_space<vmem>>, vector<1x16xf32>
    %cst_16 = arith.constant dense<0.000000e+00> : vector<16x16xf32>
    %17 = tpu.matmul %14, %15, %cst_16 {dimension_numbers = #tpu.dot_dimension_numbers<[1], [0], [0], [1], [0, 0, 1, 1], [], []>} : vector<16x128xf32>, vector<128x16xf32>, vector<16x16xf32> -> vector<16x16xf32>
    %18 = vector.broadcast %16 : vector<1x16xf32> to vector<16x16xf32>
    %19 = arith.addf %17, %18 : vector<16x16xf32>
    %c0_17 = arith.constant 0 : index
    %c0_18 = arith.constant 0 : index
    %20 = vector.load %arg8[%c0_17, %c0_18] : memref<16x16xf32, #tpu.memory_space<vmem>>, vector<16x16xf32>
    tpu.vector_store %arg8[%c0_17, %c0_18], %19 {strides = array<i32>} : memref<16x16xf32, #tpu.memory_space<vmem>>, vector<16x16xf32>,
    return
  }
  func.func @transform_0(%arg0: i32) -> (i32, i32) {
    %c0_i32 = arith.constant 0 : i32
    %c0_i32_0 = arith.constant 0 : i32
    return %arg0, %c0_i32 : i32, i32
  }
  func.func @transform_1(%arg0: i32) -> (i32, i32) {
    %c0_i32 = arith.constant 0 : i32
    %c0_i32_0 = arith.constant 0 : i32
    %c0_i32_1 = arith.constant 0 : i32
    return %c0_i32, %c0_i32_0 : i32, i32
  }
  func.func @transform_2(%arg0: i32) -> (i32, i32) {
    %c0_i32 = arith.constant 0 : i32
    %c0_i32_0 = arith.constant 0 : i32
    %c0_i32_1 = arith.constant 0 : i32
    return %c0_i32, %c0_i32_0 : i32, i32
  }
  func.func @transform_3(%arg0: i32) -> (i32, i32) {
    %c0_i32 = arith.constant 0 : i32
    %c0_i32_0 = arith.constant 0 : i32
    %c0_i32_1 = arith.constant 0 : i32
    return %c0_i32, %c0_i32_0 : i32, i32
  }
  func.func @transform_4(%arg0: i32) -> (i32, i32) {
    %c0_i32 = arith.constant 0 : i32
    %c0_i32_0 = arith.constant 0 : i32
    %c0_i32_1 = arith.constant 0 : i32
    return %c0_i32, %c0_i32_0 : i32, i32
  }
  func.func @transform_5(%arg0: i32) -> (i32, i32) {
    %c0_i32 = arith.constant 0 : i32
    %c0_i32_0 = arith.constant 0 : i32
    %c0_i32_1 = arith.constant 0 : i32
    return %c0_i32, %c0_i32_0 : i32, i32
  }
  func.func @transform_6(%arg0: i32) -> (i32, i32) {
    %c0_i32 = arith.constant 0 : i32
    %c0_i32_0 = arith.constant 0 : i32
    %c0_i32_1 = arith.constant 0 : i32
    return %c0_i32, %c0_i32_0 : i32, i32
  }
  func.func @transform_7(%arg0: i32) -> (i32, i32) {
    %c0_i32 = arith.constant 0 : i32
    %c0_i32_0 = arith.constant 0 : i32
    return %arg0, %c0_i32 : i32, i32
  }
}

module attributes {stable_mosaic.version = 11 : i64} {
  func.func @kernel(%arg0: i32, %arg1: memref<16x32xf32, #tpu.memory_space<vmem>>, %arg2: memref<32x128xf32, #tpu.memory_space<vmem>>, %arg3: memref<1x128xf32, #tpu.memory_space<vmem>>, %arg4: memref<128x128xf32, #tpu.memory_space<vmem>>, %arg5: memref<1x128xf32, #tpu.memory_space<vmem>>, %arg6: memref<128x16xf32, #tpu.memory_space<vmem>>, %arg7: memref<1x16xf32, #tpu.memory_space<vmem>>, %arg8: memref<16x16xf32, #tpu.memory_space<vmem>>) attributes {dimension_semantics = [#tpu.dimension_semantics<parallel>], iteration_bounds = array<i64: 4>, scalar_prefetch = 0 : i64, scratch_operands = 0 : i64, tpu.core_type = #tpu.core_type<tc>, window_params = [{transform_indices = @transform_0, window_bounds = array<i64: 16, 32>}, {pipeline_mode = #tpu.pipeline_mode<synchronous>, transform_indices = @transform_1, window_bounds = array<i64: 32, 128>}, {pipeline_mode = #tpu.pipeline_mode<synchronous>, transform_indices = @transform_2, window_bounds = array<i64: 1, 128>}, {pipeline_mode = #tpu.pipeline_mode<synchronous>, transform_indices = @transform_3, window_bounds = array<i64: 128, 128>}, {pipeline_mode = #tpu.pipeline_mode<synchronous>, transform_indices = @transform_4, window_bounds = array<i64: 1, 128>}, {pipeline_mode = #tpu.pipeline_mode<synchronous>, transform_indices = @transform_5, window_bounds = array<i64: 128, 16>}, {pipeline_mode = #tpu.pipeline_mode<synchronous>, transform_indices = @transform_6, window_bounds = array<i64: 1, 16>}, {transform_indices = @transform_7, window_bounds = array<i64: 16, 16>}]} {
    %c0 = arith.constant 0 : index
    %c0_0 = arith.constant 0 : index
    %0 = vector.load %arg1[%c0, %c0_0] : memref<16x32xf32, #tpu.memory_space<vmem>>, vector<16x32xf32>
    %c0_1 = arith.constant 0 : index
    %c0_2 = arith.constant 0 : index
    %1 = vector.load %arg2[%c0_1, %c0_2] : memref<32x128xf32, #tpu.memory_space<vmem>>, vector<32x128xf32>
    %c0_3 = arith.constant 0 : index
    %c0_4 = arith.constant 0 : index
    %2 = vector.load %arg3[%c0_3, %c0_4] : memref<1x128xf32, #tpu.memory_space<vmem>>, vector<1x128xf32>
    %cst = arith.constant dense<0.000000e+00> : vector<16x128xf32>
    %3 = tpu.matmul %0, %1, %cst {dimension_numbers = #tpu.dot_dimension_numbers<[1], [0], [0], [1], [0, 0, 1, 1], [], []>} : vector<16x32xf32>, vector<32x128xf32>, vector<16x128xf32> -> vector<16x128xf32>
    %4 = vector.broadcast %2 : vector<1x128xf32> to vector<16x128xf32>
    %5 = arith.addf %3, %4 : vector<16x128xf32>
    %cst_5 = arith.constant 0.000000e+00 : f32
    %6 = vector.broadcast %cst_5 : f32 to vector<16x128xf32>
    %7 = arith.maximumf %5, %6 : vector<16x128xf32>
    %c0_6 = arith.constant 0 : index
    %c0_7 = arith.constant 0 : index
    %8 = vector.load %arg4[%c0_6, %c0_7] : memref<128x128xf32, #tpu.memory_space<vmem>>, vector<128x128xf32>
    %c0_8 = arith.constant 0 : index
    %c0_9 = arith.constant 0 : index
    %9 = vector.load %arg5[%c0_8, %c0_9] : memref<1x128xf32, #tpu.memory_space<vmem>>, vector<1x128xf32>
    %cst_10 = arith.constant dense<0.000000e+00> : vector<16x128xf32>
    %10 = tpu.matmul %7, %8, %cst_10 {dimension_numbers = #tpu.dot_dimension_numbers<[1], [0], [0], [1], [0, 0, 1, 1], [], []>} : vector<16x128xf32>, vector<128x128xf32>, vector<16x128xf32> -> vector<16x128xf32>
    %11 = vector.broadcast %9 : vector<1x128xf32> to vector<16x128xf32>
    %12 = arith.addf %10, %11 : vector<16x128xf32>
    %cst_11 = arith.constant 0.000000e+00 : f32
    %13 = vector.broadcast %cst_11 : f32 to vector<16x128xf32>
    %14 = arith.maximumf %12, %13 : vector<16x128xf32>
    %c0_12 = arith.constant 0 : index
    %c0_13 = arith.constant 0 : index
    %15 = vector.load %arg6[%c0_12, %c0_13] : memref<128x16xf32, #tpu.memory_space<vmem>>, vector<128x16xf32>
    %c0_14 = arith.constant 0 : index
    %c0_15 = arith.constant 0 : index
    %16 = vector.load %arg7[%c0_14, %c0_15] : memref<1x16xf32, #tpu.memory_space<vmem>>, vector<1x16xf32>
    %cst_16 = arith.constant dense<0.000000e+00> : vector<16x16xf32>
    %17 = tpu.matmul %14, %15, %cst_16 {dimension_numbers = #tpu.dot_dimension_numbers<[1], [0], [0], [1], [0, 0, 1, 1], [], []>} : vector<16x128xf32>, vector<128x16xf32>, vector<16x16xf32> -> vector<16x16xf32>
    %18 = vector.broadcast %16 : vector<1x16xf32> to vector<16x16xf32>
    %19 = arith.addf %17, %18 : vector<16x16xf32>
    %c0_17 = arith.constant 0 : index
    %c0_18 = arith.constant 0 : index
    %20 = vector.load %arg8[%c0_17, %c0_18] : memref<16x16xf32, #tpu.memory_space<vmem>>, vector<16x16xf32>
    tpu.vector_store %arg8[%c0_17, %c0_18], %19 {strides = array<i32>} : memref<16x16xf32, #tpu.memory_space<vmem>>, vector<16x16xf32>,
    return
  }
  func.func @transform_0(%arg0: i32) -> (i32, i32) {
    %c0_i32 = arith.constant 0 : i32
    %c0_i32_0 = arith.constant 0 : i32
    return %arg0, %c0_i32 : i32, i32
  }
  func.func @transform_1(%arg0: i32) -> (i32, i32) {
    %c0_i32 = arith.constant 0 : i32
    %c0_i32_0 = arith.constant 0 : i32
    %c0_i32_1 = arith.constant 0 : i32
    return %c0_i32, %c0_i32_0 : i32, i32
  }
  func.func @transform_2(%arg0: i32) -> (i32, i32) {
    %c0_i32 = arith.constant 0 : i32
    %c0_i32_0 = arith.constant 0 : i32
    %c0_i32_1 = arith.constant 0 : i32
    return %c0_i32, %c0_i32_0 : i32, i32
  }
  func.func @transform_3(%arg0: i32) -> (i32, i32) {
    %c0_i32 = arith.constant 0 : i32
    %c0_i32_0 = arith.constant 0 : i32
    %c0_i32_1 = arith.constant 0 : i32
    return %c0_i32, %c0_i32_0 : i32, i32
  }
  func.func @transform_4(%arg0: i32) -> (i32, i32) {
    %c0_i32 = arith.constant 0 : i32
    %c0_i32_0 = arith.constant 0 : i32
    %c0_i32_1 = arith.constant 0 : i32
    return %c0_i32, %c0_i32_0 : i32, i32
  }
  func.func @transform_5(%arg0: i32) -> (i32, i32) {
    %c0_i32 = arith.constant 0 : i32
    %c0_i32_0 = arith.constant 0 : i32
    %c0_i32_1 = arith.constant 0 : i32
    return %c0_i32, %c0_i32_0 : i32, i32
  }
  func.func @transform_6(%arg0: i32) -> (i32, i32) {
    %c0_i32 = arith.constant 0 : i32
    %c0_i32_0 = arith.constant 0 : i32
    %c0_i32_1 = arith.constant 0 : i32
    return %c0_i32, %c0_i32_0 : i32, i32
  }
  func.func @transform_7(%arg0: i32) -> (i32, i32) {
    %c0_i32 = arith.constant 0 : i32
    %c0_i32_0 = arith.constant 0 : i32
    return %arg0, %c0_i32 : i32, i32
  }
}

</mosaic_0001>

<llo_original>
// kernel: tpu_custom_call.1
$region0: #{tpu_custom_call.1}
  #allocation0 [shape = 'u32[]', space=smem, size = 0x4, offset = 0x4, fixed_abs, tag = 'smem constant byte address 0x4 - core index']
  #allocation1 [shape = 'u32[144,128]{1,0:T(1,128)}', space=vmem, size = 0x12000, scoped, tag = 'internal scratch']
  %s0 = inlined_call_operand.vmem [shape: f32[64,32], index: 0, kind: input, shape index: {}]
  %s1 = inlined_call_operand.vmem [shape: f32[32,128], index: 1, kind: input, shape index: {}]
  %s2 = inlined_call_operand.vmem [shape: f32[1,128], index: 2, kind: input, shape index: {}]
  %s3 = inlined_call_operand.vmem [shape: f32[128,128], index: 3, kind: input, shape index: {}]
  %s4 = inlined_call_operand.vmem [shape: f32[1,128], index: 4, kind: input, shape index: {}]
  %s5 = inlined_call_operand.vmem [shape: f32[128,16], index: 5, kind: input, shape index: {}]
  %s6 = inlined_call_operand.vmem [shape: f32[1,16], index: 6, kind: input, shape index: {}]
  %s7 = inlined_call_operand.vmem [shape: f32[64,16], index: 7, kind: output, shape index: {}]
  %s8 = sld [smem:[#allocation0]]
  $region61: #{tpu_custom_call.1} parent=0
    _
  %s10 = ssub.s32 1, %s8
  %s11 = scalar_select 0, %s10, %s8
  loop: start=0, step=1, limit=6
  $region2: #{tpu_custom_call.1} parent=0 // loop_pre_header
    _
  $region3: #{tpu_custom_call.1} parent=0 // loop_header
    %s13 = sphi 0, %s17
    %p14 = scmp.ge.s32.totalorder %s13, 6
    %s23 = sphi 0, %s25
    %s26 = sphi 0, %s23
    %s27 = sphi 0, %s26
    %s43 = sphi 0, %s27
    %s47 = sphi 0, %s47
    %s49 = sphi 0, %s47
    %s50 = sphi 0, %s49
    %s64 = sphi 0, %s50
    %s68 = sphi 0, %s68
    %s70 = sphi 0, %s68
    %s71 = sphi 0, %s70
    %s85 = sphi 0, %s71
    %s89 = sphi 0, %s89
    %s91 = sphi 0, %s89
    %s92 = sphi 0, %s91
    %s106 = sphi 0, %s92
    %s110 = sphi 0, %s110
    %s112 = sphi 0, %s110
    %s113 = sphi 0, %s112
    %s127 = sphi 0, %s113
    %s131 = sphi 0, %s131
    %s133 = sphi 0, %s131
    %s134 = sphi 0, %s133
    %s148 = sphi 0, %s134
    %s152 = sphi 0, %s152
    %s154 = sphi 0, %s152
    %s155 = sphi 0, %s154
    %s169 = sphi 0, %s155
    %s175 = sphi 0, %s177
    %s178 = sphi 0, %s175
    %s179 = sphi 0, %s178
    %s195 = sphi 0, %s179
  $region4: #{tpu_custom_call.1} parent=0 // loop_header_branch
    %16 = sbr.rel (%p14) target = $region8
  $region5: #{tpu_custom_call.1} parent=0 // loop_body
    %s18 = ssub.s32 %s13, 1
    %s19 = ssub.s32 %s13, 2
    %s20 = sadd.s32 %s13, 1
    %s21 = ssub.s32 %s13, %s20
    %p22 = scmp.eq.s32.totalorder %s21, 0
    %s24 = sadd.s32 %s23, 1
    %s25 = scalar_select %p22, %s23, %s24
    %p28 = pneg %p22
    %p29 = scmp.eq.s32.totalorder %s13, 3
    %p30 = por %p28, %p29
    %p31 = scmp.ne.s32.totalorder %s23, %s26
    %p32 = scmp.eq.s32.totalorder %s13, 0
    %p33 = por %p31, %p32
    %p34 = scmp.ne.s32.totalorder %s23, %s26
    %p35 = scmp.eq.s32.totalorder %s18, 3
    %p36 = por %p34, %p35
    %p37 = scmp.ne.s32.totalorder %s26, %s27
    %p38 = scmp.eq.s32.totalorder %s18, 0
    %p39 = por %p37, %p38
    %p40 = scmp.ne.s32.totalorder %s26, %s27
    %p41 = scmp.eq.s32.totalorder %s19, 3
    %p42 = por %p40, %p41
    %p44 = scmp.ne.s32.totalorder %s27, %s43
    %p45 = scmp.eq.s32.totalorder %s19, 0
    %p46 = por %p44, %p45
    %s48 = sadd.s32 %s47, 1
    %p51 = scmp.eq.s32.totalorder %s13, 3
    %p52 = scmp.ne.s32.totalorder %s47, %s49
    %p53 = scmp.eq.s32.totalorder %s13, 0
    %p54 = por %p52, %p53
    %p55 = scmp.ne.s32.totalorder %s47, %s49
    %p56 = scmp.eq.s32.totalorder %s18, 3
    %p57 = por %p55, %p56
    %p58 = scmp.ne.s32.totalorder %s49, %s50
    %p59 = scmp.eq.s32.totalorder %s18, 0
    %p60 = por %p58, %p59
    %p61 = scmp.ne.s32.totalorder %s49, %s50
    %p62 = scmp.eq.s32.totalorder %s19, 3
    %p63 = por %p61, %p62
    %p65 = scmp.ne.s32.totalorder %s50, %s64
    %p66 = scmp.eq.s32.totalorder %s19, 0
    %p67 = por %p65, %p66
    %s69 = sadd.s32 %s68, 1
    %p72 = scmp.eq.s32.totalorder %s13, 3
    %p73 = scmp.ne.s32.totalorder %s68, %s70
    %p74 = scmp.eq.s32.totalorder %s13, 0
    %p75 = por %p73, %p74
    %p76 = scmp.ne.s32.totalorder %s68, %s70
    %p77 = scmp.eq.s32.totalorder %s18, 3
    %p78 = por %p76, %p77
    %p79 = scmp.ne.s32.totalorder %s70, %s71
    %p80 = scmp.eq.s32.totalorder %s18, 0
    %p81 = por %p79, %p80
    %p82 = scmp.ne.s32.totalorder %s70, %s71
    %p83 = scmp.eq.s32.totalorder %s19, 3
    %p84 = por %p82, %p83
    %p86 = scmp.ne.s32.totalorder %s71, %s85
    %p87 = scmp.eq.s32.totalorder %s19, 0
    %p88 = por %p86, %p87
    %s90 = sadd.s32 %s89, 1
    %p93 = scmp.eq.s32.totalorder %s13, 3
    %p94 = scmp.ne.s32.totalorder %s89, %s91
    %p95 = scmp.eq.s32.totalorder %s13, 0
    %p96 = por %p94, %p95
    %p97 = scmp.ne.s32.totalorder %s89, %s91
    %p98 = scmp.eq.s32.totalorder %s18, 3
    %p99 = por %p97, %p98
    %p100 = scmp.ne.s32.totalorder %s91, %s92
    %p101 = scmp.eq.s32.totalorder %s18, 0
    %p102 = por %p100, %p101
    %p103 = scmp.ne.s32.totalorder %s91, %s92
    %p104 = scmp.eq.s32.totalorder %s19, 3
    %p105 = por %p103, %p104
    %p107 = scmp.ne.s32.totalorder %s92, %s106
    %p108 = scmp.eq.s32.totalorder %s19, 0
    %p109 = por %p107, %p108
    %s111 = sadd.s32 %s110, 1
    %p114 = scmp.eq.s32.totalorder %s13, 3
    %p115 = scmp.ne.s32.totalorder %s110, %s112
    %p116 = scmp.eq.s32.totalorder %s13, 0
    %p117 = por %p115, %p116
    %p118 = scmp.ne.s32.totalorder %s110, %s112
    %p119 = scmp.eq.s32.totalorder %s18, 3
    %p120 = por %p118, %p119
    %p121 = scmp.ne.s32.totalorder %s112, %s113
    %p122 = scmp.eq.s32.totalorder %s18, 0
    %p123 = por %p121, %p122
    %p124 = scmp.ne.s32.totalorder %s112, %s113
    %p125 = scmp.eq.s32.totalorder %s19, 3
    %p126 = por %p124, %p125
    %p128 = scmp.ne.s32.totalorder %s113, %s127
    %p129 = scmp.eq.s32.totalorder %s19, 0
    %p130 = por %p128, %p129
    %s132 = sadd.s32 %s131, 1
    %p135 = scmp.eq.s32.totalorder %s13, 3
    %p136 = scmp.ne.s32.totalorder %s131, %s133
    %p137 = scmp.eq.s32.totalorder %s13, 0
    %p138 = por %p136, %p137
    %p139 = scmp.ne.s32.totalorder %s131, %s133
    %p140 = scmp.eq.s32.totalorder %s18, 3
    %p141 = por %p139, %p140
    %p142 = scmp.ne.s32.totalorder %s133, %s134
    %p143 = scmp.eq.s32.totalorder %s18, 0
    %p144 = por %p142, %p143
    %p145 = scmp.ne.s32.totalorder %s133, %s134
    %p146 = scmp.eq.s32.totalorder %s19, 3
    %p147 = por %p145, %p146
    %p149 = scmp.ne.s32.totalorder %s134, %s148
    %p150 = scmp.eq.s32.totalorder %s19, 0
    %p151 = por %p149, %p150
    %s153 = sadd.s32 %s152, 1
    %p156 = scmp.eq.s32.totalorder %s13, 3
    %p157 = scmp.ne.s32.totalorder %s152, %s154
    %p158 = scmp.eq.s32.totalorder %s13, 0
    %p159 = por %p157, %p158
    %p160 = scmp.ne.s32.totalorder %s152, %s154
    %p161 = scmp.eq.s32.totalorder %s18, 3
    %p162 = por %p160, %p161
    %p163 = scmp.ne.s32.totalorder %s154, %s155
    %p164 = scmp.eq.s32.totalorder %s18, 0
    %p165 = por %p163, %p164
    %p166 = scmp.ne.s32.totalorder %s154, %s155
    %p167 = scmp.eq.s32.totalorder %s19, 3
    %p168 = por %p166, %p167
    %p170 = scmp.ne.s32.totalorder %s155, %s169
    %p171 = scmp.eq.s32.totalorder %s19, 0
    %p172 = por %p170, %p171
    %s173 = ssub.s32 %s13, %s20
    %p174 = scmp.eq.s32.totalorder %s173, 0
    %s176 = sadd.s32 %s175, 1
    %s177 = scalar_select %p174, %s175, %s176
    %p180 = pneg %p174
    %p181 = scmp.eq.s32.totalorder %s13, 3
    %p182 = por %p180, %p181
    %p183 = scmp.ne.s32.totalorder %s175, %s178
    %p184 = scmp.eq.s32.totalorder %s13, 0
    %p185 = por %p183, %p184
    %p186 = scmp.ne.s32.totalorder %s175, %s178
    %p187 = scmp.eq.s32.totalorder %s18, 3
    %p188 = por %p186, %p187
    %p189 = scmp.ne.s32.totalorder %s178, %s179
    %p190 = scmp.eq.s32.totalorder %s18, 0
    %p191 = por %p189, %p190
    %p192 = scmp.ne.s32.totalorder %s178, %s179
    %p193 = scmp.eq.s32.totalorder %s19, 3
    %p194 = por %p192, %p193
    %p196 = scmp.ne.s32.totalorder %s179, %s195
    %p197 = scmp.eq.s32.totalorder %s19, 0
    %p198 = por %p196, %p197
    %p199 = scmp.le.s32.totalorder 1, %s13
    %p200 = scmp.lt.s32.totalorder %s13, 5
    %p201 = pnand %p199, %p200
    %p202 = pneg %p201
    // Predicated region
    $region9: #{tpu_custom_call.1} parent=5 // pred_check
      _
    $region10: #{tpu_custom_call.1} parent=5 // pred_check_branch
      %204 = sbr.rel (%p201) target = $region12
    $region11: #{tpu_custom_call.1} parent=5 // pred_region
      %s205 = ssub.s32 %s13, 1
      // Predicated region
      $region13: #{tpu_custom_call.1} parent=11 // pred_check
        %p206 = pneg %p60
      $region14: #{tpu_custom_call.1} parent=11 // pred_check_branch
        %208 = sbr.rel (%p206) target = $region16
      $region15: #{tpu_custom_call.1} parent=11 // pred_region
        _
      $region16: #{tpu_custom_call.1} parent=11 // pred_fallthru
        _
      // Predicated region
      $region17: #{tpu_custom_call.1} parent=11 // pred_check
        %p209 = pneg %p81
      $region18: #{tpu_custom_call.1} parent=11 // pred_check_branch
        %211 = sbr.rel (%p209) target = $region20
      $region19: #{tpu_custom_call.1} parent=11 // pred_region
        _
      $region20: #{tpu_custom_call.1} parent=11 // pred_fallthru
        _
      // Predicated region
      $region21: #{tpu_custom_call.1} parent=11 // pred_check
        %p212 = pneg %p102
      $region22: #{tpu_custom_call.1} parent=11 // pred_check_branch
        %214 = sbr.rel (%p212) target = $region24
      $region23: #{tpu_custom_call.1} parent=11 // pred_region
        _
      $region24: #{tpu_custom_call.1} parent=11 // pred_fallthru
        _
      // Predicated region
      $region25: #{tpu_custom_call.1} parent=11 // pred_check
        %p215 = pneg %p123
      $region26: #{tpu_custom_call.1} parent=11 // pred_check_branch
        %217 = sbr.rel (%p215) target = $region28
      $region27: #{tpu_custom_call.1} parent=11 // pred_region
        _
      $region28: #{tpu_custom_call.1} parent=11 // pred_fallthru
        _
      // Predicated region
      $region29: #{tpu_custom_call.1} parent=11 // pred_check
        %p218 = pneg %p144
      $region30: #{tpu_custom_call.1} parent=11 // pred_check_branch
        %220 = sbr.rel (%p218) target = $region32
      $region31: #{tpu_custom_call.1} parent=11 // pred_region
        _
      $region32: #{tpu_custom_call.1} parent=11 // pred_fallthru
        _
      // Predicated region
      $region33: #{tpu_custom_call.1} parent=11 // pred_check
        %p221 = pneg %p165
      $region34: #{tpu_custom_call.1} parent=11 // pred_check_branch
        %223 = sbr.rel (%p221) target = $region36
      $region35: #{tpu_custom_call.1} parent=11 // pred_region
        _
      $region36: #{tpu_custom_call.1} parent=11 // pred_fallthru
        _
    $region12: #{tpu_custom_call.1} parent=5 // pred_fallthru
      _
    %p224 = scmp.lt.s32.totalorder %s13, 4
    // Predicated region
    $region37: #{tpu_custom_call.1} parent=5 // pred_check
      %p225 = pneg %p224
    $region38: #{tpu_custom_call.1} parent=5 // pred_check_branch
      %227 = sbr.rel (%p225) target = $region40
    $region39: #{tpu_custom_call.1} parent=5 // pred_region
      // Predicated region
      $region41: #{tpu_custom_call.1} parent=39 // pred_check
        %p228 = pneg %p33
      $region42: #{tpu_custom_call.1} parent=39 // pred_check_branch
        %230 = sbr.rel (%p228) target = $region44
      $region43: #{tpu_custom_call.1} parent=39 // pred_region
        %s231 = smul.u32 2, %s13
        %p232 = scmp.lt.s32.totalorder %s231, 7
        %s233 = scalar_select %p232, %s231, 7
        %s234 = smul.addr %s233, 8
        %s235 = scalar_lea.vmem %s0, %s234
        %s236 = smul.u32 2, %s13
      $region44: #{tpu_custom_call.1} parent=39 // pred_fallthru
        _
    $region40: #{tpu_custom_call.1} parent=5 // pred_fallthru
      _
    %p237 = scmp.le.s32.totalorder 1, %s13
    %p238 = scmp.lt.s32.totalorder %s13, 5
    %p239 = pnand %p237, %p238
    %p240 = pneg %p239
    // Predicated region
    $region45: #{tpu_custom_call.1} parent=5 // pred_check
      _
    $region46: #{tpu_custom_call.1} parent=5 // pred_check_branch
      %242 = sbr.rel (%p239) target = $region48
    $region47: #{tpu_custom_call.1} parent=5 // pred_region
      %s243 = ssub.s32 %s13, 1
      %s244 = smul.u32 2, %s18
      %p245 = scmp.lt.s32.totalorder %s244, 7
      %s246 = scalar_select %p245, %s244, 7
      %s247 = smul.addr %s246, 8
      %s248 = scalar_lea.vmem %s0, %s247
      %p249 = pneg %p39
      %p250 = pneg %p36
      %p251 = pneg %p60
      %p252 = pneg %p57
      %p253 = pneg %p81
      %p254 = pneg %p78
      %p255 = pneg %p102
      %p256 = pneg %p99
      %p257 = pneg %p123
      %p258 = pneg %p120
      %p259 = pneg %p144
      %p260 = pneg %p141
      %p261 = pneg %p165
      %p262 = pneg %p162
      %p263 = pneg %p191
      %p264 = pneg %p188
      %s265 = smul.u32 2, %s18
      %p266 = scmp.lt.s32.totalorder %s265, 7
      %s267 = scalar_select %p266, %s265, 7
      %s268 = smul.addr %s267, 8
      %s269 = scalar_lea.vmem %s7, %s268
      %s270 = smul.u32 2, %s18
      %p271 = scmp.lt.s32.totalorder %s270, 7
      %s272 = scalar_select %p271, %s270, 7
      %s273 = smul.addr %s272, 8
      %s274 = scalar_lea.vmem %s0, %s273
      %s275 = smul.u32 2, %s18
      %s276 = smul.u32 2, %s18
      %p277 = scmp.lt.s32.totalorder %s276, 7
      %s278 = scalar_select %p277, %s276, 7
      %s279 = smul.addr %s278, 8
      %s280 = scalar_lea.vmem %s7, %s279
      %s281 = smul.u32 2, %s18
      %v282 = vld [vmem:[%s274] sm:$0xff]
      %v283 = vld [vmem:[%s274 + $0x8] sm:$0xff]
      %v284 = vld [vmem:[%s1] sm:$0xff]
      %v285 = vld [vmem:[%s1 + $0x8] sm:$0xff]
      %v286 = vld [vmem:[%s1 + $0x10] sm:$0xff]
      %v287 = vld [vmem:[%s1 + $0x18] sm:$0xff]
      %v288 = vld [vmem:[%s2] sm:$0x1]
      %v290 = vlaneseq
      %v291 = vshrl.u32 %v290, 7
      %v292 = vsub.s32 0, %v291
      %v293 = vrot.slane %v288, %v292
      %vm295 = vcmask 261120
      %v297 = vsel %vm295, %v282, 0
      %v300 = vsel %vm295, %v283, 0
      %302 = vmatprep.subr.mxu0 0.0
      %303 = vmatpush1.msra.mxu0 0.0
      %304 = vmatprep.subr.mxu0 0.0
      %305 = vmatpush1.msra.mxu0 0.0
      %306 = vmatprep.subr.mxu0 0.0
      %307 = vmatpush1.msra.mxu0 0.0
      %308 = vmatprep.subr.mxu0 0.0
      %309 = vmatpush1.msra.mxu0 0.0
      %310 = vmatprep.subr.mxu0 0.0
      %311 = vmatpush1.msra.mxu0 0.0
      %312 = vmatprep.subr.mxu0 0.0
      %313 = vmatpush1.msra.mxu0 0.0
      %314 = vmatprep.subr.mxu0 0.0
      %315 = vmatpush1.msra.mxu0 0.0
      %316 = vmatprep.subr.mxu0 0.0
      %317 = vmatpush1.msra.mxu0 0.0
      %318 = vmatprep.subr.mxu0 0.0
      %319 = vmatpush1.msra.mxu0 0.0
      %320 = vmatprep.subr.mxu0 0.0
      %321 = vmatpush1.msra.mxu0 0.0
      %322 = vmatprep.subr.mxu0 0.0
      %323 = vmatpush1.msra.mxu0 0.0
      %324 = vmatprep.subr.mxu0 0.0
      %325 = vmatpush1.msra.mxu0 0.0
      %326 = vmatprep.subr.mxu0 0.0
      %327 = vmatpush1.msra.mxu0 %v287
      %328 = vmatprep.subr.mxu0 0.0
      %329 = vmatpush1.msra.mxu0 %v286
      %330 = vmatprep.subr.mxu0 0.0
      %331 = vmatpush1.msra.mxu0 %v285
      %332 = vmatprep.subr.mxu0 0.0
      %333 = vmatpush1.msra.mxu0 %v284
      %334 = vmatprep.subr.mxu0 0.0
      %335 = vmatpush2.msra.mxu0 0.0
      %336 = vmatprep.subr.mxu0 0.0
      %337 = vmatpush2.msra.mxu0 0.0
      %338 = vmatprep.subr.mxu0 0.0
      %339 = vmatpush2.msra.mxu0 0.0
      %340 = vmatprep.subr.mxu0 0.0
      %341 = vmatpush2.msra.mxu0 0.0
      %342 = vmatprep.subr.mxu0 0.0
      %343 = vmatpush2.msra.mxu0 0.0
      %344 = vmatprep.subr.mxu0 0.0
      %345 = vmatpush2.msra.mxu0 0.0
      %346 = vmatprep.subr.mxu0 0.0
      %347 = vmatpush2.msra.mxu0 0.0
      %348 = vmatprep.subr.mxu0 0.0
      %349 = vmatpush2.msra.mxu0 0.0
      %350 = vmatprep.subr.mxu0 0.0
      %351 = vmatpush2.msra.mxu0 0.0
      %352 = vmatprep.subr.mxu0 0.0
      %353 = vmatpush2.msra.mxu0 0.0
      %354 = vmatprep.subr.mxu0 0.0
      %355 = vmatpush2.msra.mxu0 0.0
      %356 = vmatprep.subr.mxu0 0.0
      %357 = vmatpush2.msra.mxu0 0.0
      %358 = vmatprep.subr.mxu0 0.0
      %359 = vmatpush2.msra.mxu0 0.0
      %360 = vmatprep.subr.mxu0 0.0
      %361 = vmatpush2.msra.mxu0 0.0
      %362 = vmatprep.subr.mxu0 0.0
      %363 = vmatpush2.msra.mxu0 0.0
      %364 = vmatprep.subr.mxu0 0.0
      %365 = vmatpush2.msra.mxu0 0.0
      %366 = vmatprep.mubr.f32.mxu0 0.0
      %367 = vmatmul.mubr.f32.gmra.mxu0 %v297
      %v368 = vpop.f32.mrf.mxu0
      %v369 = vadd.f32 %v293, %v368
      %v370 = vpop.f32.mrf.mxu0
      %371 = vmatprep.mubr.f32.mxu0 0.0
      %372 = vmatmul.mubr.f32.gmra.mxu0 %v300
      %v373 = vpop.f32.mrf.mxu0
      %v374 = vadd.f32 %v293, %v373
      %v375 = vpop.f32.mrf.mxu0
      %376 = vdwg.mxu0
      %v377 = vmax.f32 %v369, 0.0
      %v378 = vmax.f32 %v374, 0.0
      %v379 = vld [vmem:[%s3] sm:$0xff]
      %v380 = vld [vmem:[%s3 + $0x8] sm:$0xff]
      %v381 = vld [vmem:[%s3 + $0x10] sm:$0xff]
      %v382 = vld [vmem:[%s3 + $0x18] sm:$0xff]
      %v383 = vld [vmem:[%s3 + $0x20] sm:$0xff]
      %v384 = vld [vmem:[%s3 + $0x28] sm:$0xff]
      %v385 = vld [vmem:[%s3 + $0x30] sm:$0xff]
      %v386 = vld [vmem:[%s3 + $0x38] sm:$0xff]
      %v387 = vld [vmem:[%s3 + $0x40] sm:$0xff]
      %v388 = vld [vmem:[%s3 + $0x48] sm:$0xff]
      %v389 = vld [vmem:[%s3 + $0x50] sm:$0xff]
      %v390 = vld [vmem:[%s3 + $0x58] sm:$0xff]
      %v391 = vld [vmem:[%s3 + $0x60] sm:$0xff]
      %v392 = vld [vmem:[%s3 + $0x68] sm:$0xff]
      %v393 = vld [vmem:[%s3 + $0x70] sm:$0xff]
      %v394 = vld [vmem:[%s3 + $0x78] sm:$0xff]
      %v395 = vld [vmem:[%s4] sm:$0x1]
      %v397 = vlaneseq
      %v398 = vshrl.u32 %v397, 7
      %v399 = vsub.s32 0, %v398
      %v400 = vrot.slane %v395, %v399
      %402 = vmatprep.subr.mxu0 0.0
      %403 = vmatpush1.msra.mxu0 %v394
      %404 = vmatprep.subr.mxu0 0.0
      %405 = vmatpush1.msra.mxu0 %v393
      %406 = vmatprep.subr.mxu0 0.0
      %407 = vmatpush1.msra.mxu0 %v392
      %408 = vmatprep.subr.mxu0 0.0
      %409 = vmatpush1.msra.mxu0 %v391
      %410 = vmatprep.subr.mxu0 0.0
      %411 = vmatpush1.msra.mxu0 %v390
      %412 = vmatprep.subr.mxu0 0.0
      %413 = vmatpush1.msra.mxu0 %v389
      %414 = vmatprep.subr.mxu0 0.0
      %415 = vmatpush1.msra.mxu0 %v388
      %416 = vmatprep.subr.mxu0 0.0
      %417 = vmatpush1.msra.mxu0 %v387
      %418 = vmatprep.subr.mxu0 0.0
      %419 = vmatpush1.msra.mxu0 %v386
      %420 = vmatprep.subr.mxu0 0.0
      %421 = vmatpush1.msra.mxu0 %v385
      %422 = vmatprep.subr.mxu0 0.0
      %423 = vmatpush1.msra.mxu0 %v384
      %424 = vmatprep.subr.mxu0 0.0
      %425 = vmatpush1.msra.mxu0 %v383
      %426 = vmatprep.subr.mxu0 0.0
      %427 = vmatpush1.msra.mxu0 %v382
      %428 = vmatprep.subr.mxu0 0.0
      %429 = vmatpush1.msra.mxu0 %v381
      %430 = vmatprep.subr.mxu0 0.0
      %431 = vmatpush1.msra.mxu0 %v380
      %432 = vmatprep.subr.mxu0 0.0
      %433 = vmatpush1.msra.mxu0 %v379
      %434 = vmatprep.subr.mxu0 0.0
      %435 = vmatpush2.msra.mxu0 0.0
      %436 = vmatprep.subr.mxu0 0.0
      %437 = vmatpush2.msra.mxu0 0.0
      %438 = vmatprep.subr.mxu0 0.0
      %439 = vmatpush2.msra.mxu0 0.0
      %440 = vmatprep.subr.mxu0 0.0
      %441 = vmatpush2.msra.mxu0 0.0
      %442 = vmatprep.subr.mxu0 0.0
      %443 = vmatpush2.msra.mxu0 0.0
      %444 = vmatprep.subr.mxu0 0.0
      %445 = vmatpush2.msra.mxu0 0.0
      %446 = vmatprep.subr.mxu0 0.0
      %447 = vmatpush2.msra.mxu0 0.0
      %448 = vmatprep.subr.mxu0 0.0
      %449 = vmatpush2.msra.mxu0 0.0
      %450 = vmatprep.subr.mxu0 0.0
      %451 = vmatpush2.msra.mxu0 0.0
      %452 = vmatprep.subr.mxu0 0.0
      %453 = vmatpush2.msra.mxu0 0.0
      %454 = vmatprep.subr.mxu0 0.0
      %455 = vmatpush2.msra.mxu0 0.0
      %456 = vmatprep.subr.mxu0 0.0
      %457 = vmatpush2.msra.mxu0 0.0
      %458 = vmatprep.subr.mxu0 0.0
      %459 = vmatpush2.msra.mxu0 0.0
      %460 = vmatprep.subr.mxu0 0.0
      %461 = vmatpush2.msra.mxu0 0.0
      %462 = vmatprep.subr.mxu0 0.0
      %463 = vmatpush2.msra.mxu0 0.0
      %464 = vmatprep.subr.mxu0 0.0
      %465 = vmatpush2.msra.mxu0 0.0
      %466 = vmatprep.mubr.f32.mxu0 0.0
      %467 = vmatmul.mubr.f32.gmra.mxu0 %v377
      %v468 = vpop.f32.mrf.mxu0
      %v469 = vadd.f32 %v400, %v468
      %v470 = vpop.f32.mrf.mxu0
      %471 = vmatprep.mubr.f32.mxu0 0.0
      %472 = vmatmul.mubr.f32.gmra.mxu0 %v378
      %v473 = vpop.f32.mrf.mxu0
      %v474 = vadd.f32 %v400, %v473
      %v475 = vpop.f32.mrf.mxu0
      %476 = vdwg.mxu0
      %v477 = vmax.f32 %v469, 0.0
      %v478 = vmax.f32 %v474, 0.0
      %v479 = vld [vmem:[%s5] sm:$0xff]
      %v480 = vld [vmem:[%s5 + $0x8] sm:$0xff]
      %v481 = vld [vmem:[%s5 + $0x10] sm:$0xff]
      %v482 = vld [vmem:[%s5 + $0x18] sm:$0xff]
      %v483 = vld [vmem:[%s5 + $0x20] sm:$0xff]
      %v484 = vld [vmem:[%s5 + $0x28] sm:$0xff]
      %v485 = vld [vmem:[%s5 + $0x30] sm:$0xff]
      %v486 = vld [vmem:[%s5 + $0x38] sm:$0xff]
      %v487 = vld [vmem:[%s5 + $0x40] sm:$0xff]
      %v488 = vld [vmem:[%s5 + $0x48] sm:$0xff]
      %v489 = vld [vmem:[%s5 + $0x50] sm:$0xff]
      %v490 = vld [vmem:[%s5 + $0x58] sm:$0xff]
      %v491 = vld [vmem:[%s5 + $0x60] sm:$0xff]
      %v492 = vld [vmem:[%s5 + $0x68] sm:$0xff]
      %v493 = vld [vmem:[%s5 + $0x70] sm:$0xff]
      %v494 = vld [vmem:[%s5 + $0x78] sm:$0xff]
      %v495 = vld [vmem:[%s6] sm:$0x1]
      %v497 = vlaneseq
      %v498 = vshrl.u32 %v497, 7
      %v499 = vsub.s32 0, %v498
      %v500 = vrot.slane %v495, %v499
      %502 = vmatprep.subr.mxu0 0.0
      %503 = vmatpush1.msra.mxu0 %v494
      %504 = vmatprep.subr.mxu0 0.0
      %505 = vmatpush1.msra.mxu0 %v493
      %506 = vmatprep.subr.mxu0 0.0
      %507 = vmatpush1.msra.mxu0 %v492
      %508 = vmatprep.subr.mxu0 0.0
      %509 = vmatpush1.msra.mxu0 %v491
      %510 = vmatprep.subr.mxu0 0.0
      %511 = vmatpush1.msra.mxu0 %v490
      %512 = vmatprep.subr.mxu0 0.0
      %513 = vmatpush1.msra.mxu0 %v489
      %514 = vmatprep.subr.mxu0 0.0
      %515 = vmatpush1.msra.mxu0 %v488
      %516 = vmatprep.subr.mxu0 0.0
      %517 = vmatpush1.msra.mxu0 %v487
      %518 = vmatprep.subr.mxu0 0.0
      %519 = vmatpush1.msra.mxu0 %v486
      %520 = vmatprep.subr.mxu0 0.0
      %521 = vmatpush1.msra.mxu0 %v485
      %522 = vmatprep.subr.mxu0 0.0
      %523 = vmatpush1.msra.mxu0 %v484
      %524 = vmatprep.subr.mxu0 0.0
      %525 = vmatpush1.msra.mxu0 %v483
      %526 = vmatprep.subr.mxu0 0.0
      %527 = vmatpush1.msra.mxu0 %v482
      %528 = vmatprep.subr.mxu0 0.0
      %529 = vmatpush1.msra.mxu0 %v481
      %530 = vmatprep.subr.mxu0 0.0
      %531 = vmatpush1.msra.mxu0 %v480
      %532 = vmatprep.subr.mxu0 0.0
      %533 = vmatpush1.msra.mxu0 %v479
      %534 = vmatprep.subr.mxu0 0.0
      %535 = vmatpush2.msra.mxu0 0.0
      %536 = vmatprep.subr.mxu0 0.0
      %537 = vmatpush2.msra.mxu0 0.0
      %538 = vmatprep.subr.mxu0 0.0
      %539 = vmatpush2.msra.mxu0 0.0
      %540 = vmatprep.subr.mxu0 0.0
      %541 = vmatpush2.msra.mxu0 0.0
      %542 = vmatprep.subr.mxu0 0.0
      %543 = vmatpush2.msra.mxu0 0.0
      %544 = vmatprep.subr.mxu0 0.0
      %545 = vmatpush2.msra.mxu0 0.0
      %546 = vmatprep.subr.mxu0 0.0
      %547 = vmatpush2.msra.mxu0 0.0
      %548 = vmatprep.subr.mxu0 0.0
      %549 = vmatpush2.msra.mxu0 0.0
      %550 = vmatprep.subr.mxu0 0.0
      %551 = vmatpush2.msra.mxu0 0.0
      %552 = vmatprep.subr.mxu0 0.0
      %553 = vmatpush2.msra.mxu0 0.0
      %554 = vmatprep.subr.mxu0 0.0
      %555 = vmatpush2.msra.mxu0 0.0
      %556 = vmatprep.subr.mxu0 0.0
      %557 = vmatpush2.msra.mxu0 0.0
      %558 = vmatprep.subr.mxu0 0.0
      %559 = vmatpush2.msra.mxu0 0.0
      %560 = vmatprep.subr.mxu0 0.0
      %561 = vmatpush2.msra.mxu0 0.0
      %562 = vmatprep.subr.mxu0 0.0
      %563 = vmatpush2.msra.mxu0 0.0
      %564 = vmatprep.subr.mxu0 0.0
      %565 = vmatpush2.msra.mxu0 0.0
      %566 = vmatprep.mubr.f32.mxu0 0.0
      %567 = vmatmul.mubr.f32.gmra.mxu0 %v477
      %v568 = vpop.f32.mrf.mxu0
      %v569 = vadd.f32 %v500, %v568
      %v570 = vpop.f32.mrf.mxu0
      %571 = vmatprep.mubr.f32.mxu0 0.0
      %572 = vmatmul.mubr.f32.gmra.mxu0 %v478
      %v573 = vpop.f32.mrf.mxu0
      %v574 = vadd.f32 %v500, %v573
      %v575 = vpop.f32.mrf.mxu0
      %576 = vdwg.mxu0
      %vm577 = vcmask 130048
      %578 = vst.msk [vmem:[%s280] sm:$0xff] %vm577, %v569
      %579 = vst.msk [vmem:[%s280 + $0x8] sm:$0xff] %vm577, %v574
      %s580 = smul.u32 2, %s18
      %p581 = scmp.lt.s32.totalorder %s580, 7
      %s582 = scalar_select %p581, %s580, 7
      %s583 = smul.addr %s582, 8
      %s584 = scalar_lea.vmem %s7, %s583
      // Predicated region
      $region49: #{tpu_custom_call.1} parent=47 // pred_check
        %p585 = pneg %p188
      $region50: #{tpu_custom_call.1} parent=47 // pred_check_branch
        %587 = sbr.rel (%p585) target = $region52
      $region51: #{tpu_custom_call.1} parent=47 // pred_region
        %s588 = smul.u32 2, %s18
      $region52: #{tpu_custom_call.1} parent=47 // pred_fallthru
        _
    $region48: #{tpu_custom_call.1} parent=5 // pred_fallthru
      _
    %p589 = scmp.le.s32.totalorder 2, %s13
    // Predicated region
    $region53: #{tpu_custom_call.1} parent=5 // pred_check
      %p590 = pneg %p589
    $region54: #{tpu_custom_call.1} parent=5 // pred_check_branch
      %592 = sbr.rel (%p590) target = $region56
    $region55: #{tpu_custom_call.1} parent=5 // pred_region
      %s593 = ssub.s32 %s13, 2
      // Predicated region
      $region57: #{tpu_custom_call.1} parent=55 // pred_check
        %p594 = pneg %p194
      $region58: #{tpu_custom_call.1} parent=55 // pred_check_branch
        %596 = sbr.rel (%p594) target = $region60
      $region59: #{tpu_custom_call.1} parent=55 // pred_region
        %s597 = smul.u32 2, %s19
        %p598 = scmp.lt.s32.totalorder %s597, 7
        %s599 = scalar_select %p598, %s597, 7
        %s600 = smul.addr %s599, 8
        %s601 = scalar_lea.vmem %s7, %s600
      $region60: #{tpu_custom_call.1} parent=55 // pred_fallthru
        _
    $region56: #{tpu_custom_call.1} parent=5 // pred_fallthru
      _
  $region6: #{tpu_custom_call.1} parent=0 // loop_footer
    %s17 = sadd.s32 1, %s13
  $region7: #{tpu_custom_call.1} parent=0 // loop_footer_branch
    %12 = sbr.rel target = $region3
  $region8: #{tpu_custom_call.1} parent=0 // loop_exit
    _

// kernel: tpu_custom_call.1
$region0: #{tpu_custom_call.1}
  #allocation0 [shape = 'u32[]', space=smem, size = 0x4, offset = 0x4, fixed_abs, tag = 'smem constant byte address 0x4 - core index']
  #allocation1 [shape = 'u32[144,128]{1,0:T(1,128)}', space=vmem, size = 0x12000, scoped, tag = 'internal scratch']
  %s0 = inlined_call_operand.vmem [shape: f32[64,32], index: 0, kind: input, shape index: {}]
  %s1 = inlined_call_operand.vmem [shape: f32[32,128], index: 1, kind: input, shape index: {}]
  %s2 = inlined_call_operand.vmem [shape: f32[1,128], index: 2, kind: input, shape index: {}]
  %s3 = inlined_call_operand.vmem [shape: f32[128,128], index: 3, kind: input, shape index: {}]
  %s4 = inlined_call_operand.vmem [shape: f32[1,128], index: 4, kind: input, shape index: {}]
  %s5 = inlined_call_operand.vmem [shape: f32[128,16], index: 5, kind: input, shape index: {}]
  %s6 = inlined_call_operand.vmem [shape: f32[1,16], index: 6, kind: input, shape index: {}]
  %s7 = inlined_call_operand.vmem [shape: f32[64,16], index: 7, kind: output, shape index: {}]
  %s8 = sld [smem:[#allocation0]]
  $region61: #{tpu_custom_call.1} parent=0
    _
  %s10 = ssub.s32 1, %s8
  %s11 = scalar_select 0, %s10, %s8
  loop: start=0, step=1, limit=6
  $region2: #{tpu_custom_call.1} parent=0 // loop_pre_header
    _
  $region3: #{tpu_custom_call.1} parent=0 // loop_header
    %s13 = sphi 0, %s17
    %p14 = scmp.ge.s32.totalorder %s13, 6
    %s23 = sphi 0, %s25
    %s26 = sphi 0, %s23
    %s27 = sphi 0, %s26
    %s43 = sphi 0, %s27
    %s47 = sphi 0, %s47
    %s49 = sphi 0, %s47
    %s50 = sphi 0, %s49
    %s64 = sphi 0, %s50
    %s68 = sphi 0, %s68
    %s70 = sphi 0, %s68
    %s71 = sphi 0, %s70
    %s85 = sphi 0, %s71
    %s89 = sphi 0, %s89
    %s91 = sphi 0, %s89
    %s92 = sphi 0, %s91
    %s106 = sphi 0, %s92
    %s110 = sphi 0, %s110
    %s112 = sphi 0, %s110
    %s113 = sphi 0, %s112
    %s127 = sphi 0, %s113
    %s131 = sphi 0, %s131
    %s133 = sphi 0, %s131
    %s134 = sphi 0, %s133
    %s148 = sphi 0, %s134
    %s152 = sphi 0, %s152
    %s154 = sphi 0, %s152
    %s155 = sphi 0, %s154
    %s169 = sphi 0, %s155
    %s175 = sphi 0, %s177
    %s178 = sphi 0, %s175
    %s179 = sphi 0, %s178
    %s195 = sphi 0, %s179
  $region4: #{tpu_custom_call.1} parent=0 // loop_header_branch
    %16 = sbr.rel (%p14) target = $region8
  $region5: #{tpu_custom_call.1} parent=0 // loop_body
    %s18 = ssub.s32 %s13, 1
    %s19 = ssub.s32 %s13, 2
    %s20 = sadd.s32 %s13, 1
    %s21 = ssub.s32 %s13, %s20
    %p22 = scmp.eq.s32.totalorder %s21, 0
    %s24 = sadd.s32 %s23, 1
    %s25 = scalar_select %p22, %s23, %s24
    %p28 = pneg %p22
    %p29 = scmp.eq.s32.totalorder %s13, 3
    %p30 = por %p28, %p29
    %p31 = scmp.ne.s32.totalorder %s23, %s26
    %p32 = scmp.eq.s32.totalorder %s13, 0
    %p33 = por %p31, %p32
    %p34 = scmp.ne.s32.totalorder %s23, %s26
    %p35 = scmp.eq.s32.totalorder %s18, 3
    %p36 = por %p34, %p35
    %p37 = scmp.ne.s32.totalorder %s26, %s27
    %p38 = scmp.eq.s32.totalorder %s18, 0
    %p39 = por %p37, %p38
    %p40 = scmp.ne.s32.totalorder %s26, %s27
    %p41 = scmp.eq.s32.totalorder %s19, 3
    %p42 = por %p40, %p41
    %p44 = scmp.ne.s32.totalorder %s27, %s43
    %p45 = scmp.eq.s32.totalorder %s19, 0
    %p46 = por %p44, %p45
    %s48 = sadd.s32 %s47, 1
    %p51 = scmp.eq.s32.totalorder %s13, 3
    %p52 = scmp.ne.s32.totalorder %s47, %s49
    %p53 = scmp.eq.s32.totalorder %s13, 0
    %p54 = por %p52, %p53
    %p55 = scmp.ne.s32.totalorder %s47, %s49
    %p56 = scmp.eq.s32.totalorder %s18, 3
    %p57 = por %p55, %p56
    %p58 = scmp.ne.s32.totalorder %s49, %s50
    %p59 = scmp.eq.s32.totalorder %s18, 0
    %p60 = por %p58, %p59
    %p61 = scmp.ne.s32.totalorder %s49, %s50
    %p62 = scmp.eq.s32.totalorder %s19, 3
    %p63 = por %p61, %p62
    %p65 = scmp.ne.s32.totalorder %s50, %s64
    %p66 = scmp.eq.s32.totalorder %s19, 0
    %p67 = por %p65, %p66
    %s69 = sadd.s32 %s68, 1
    %p72 = scmp.eq.s32.totalorder %s13, 3
    %p73 = scmp.ne.s32.totalorder %s68, %s70
    %p74 = scmp.eq.s32.totalorder %s13, 0
    %p75 = por %p73, %p74
    %p76 = scmp.ne.s32.totalorder %s68, %s70
    %p77 = scmp.eq.s32.totalorder %s18, 3
    %p78 = por %p76, %p77
    %p79 = scmp.ne.s32.totalorder %s70, %s71
    %p80 = scmp.eq.s32.totalorder %s18, 0
    %p81 = por %p79, %p80
    %p82 = scmp.ne.s32.totalorder %s70, %s71
    %p83 = scmp.eq.s32.totalorder %s19, 3
    %p84 = por %p82, %p83
    %p86 = scmp.ne.s32.totalorder %s71, %s85
    %p87 = scmp.eq.s32.totalorder %s19, 0
    %p88 = por %p86, %p87
    %s90 = sadd.s32 %s89, 1
    %p93 = scmp.eq.s32.totalorder %s13, 3
    %p94 = scmp.ne.s32.totalorder %s89, %s91
    %p95 = scmp.eq.s32.totalorder %s13, 0
    %p96 = por %p94, %p95
    %p97 = scmp.ne.s32.totalorder %s89, %s91
    %p98 = scmp.eq.s32.totalorder %s18, 3
    %p99 = por %p97, %p98
    %p100 = scmp.ne.s32.totalorder %s91, %s92
    %p101 = scmp.eq.s32.totalorder %s18, 0
    %p102 = por %p100, %p101
    %p103 = scmp.ne.s32.totalorder %s91, %s92
    %p104 = scmp.eq.s32.totalorder %s19, 3
    %p105 = por %p103, %p104
    %p107 = scmp.ne.s32.totalorder %s92, %s106
    %p108 = scmp.eq.s32.totalorder %s19, 0
    %p109 = por %p107, %p108
    %s111 = sadd.s32 %s110, 1
    %p114 = scmp.eq.s32.totalorder %s13, 3
    %p115 = scmp.ne.s32.totalorder %s110, %s112
    %p116 = scmp.eq.s32.totalorder %s13, 0
    %p117 = por %p115, %p116
    %p118 = scmp.ne.s32.totalorder %s110, %s112
    %p119 = scmp.eq.s32.totalorder %s18, 3
    %p120 = por %p118, %p119
    %p121 = scmp.ne.s32.totalorder %s112, %s113
    %p122 = scmp.eq.s32.totalorder %s18, 0
    %p123 = por %p121, %p122
    %p124 = scmp.ne.s32.totalorder %s112, %s113
    %p125 = scmp.eq.s32.totalorder %s19, 3
    %p126 = por %p124, %p125
    %p128 = scmp.ne.s32.totalorder %s113, %s127
    %p129 = scmp.eq.s32.totalorder %s19, 0
    %p130 = por %p128, %p129
    %s132 = sadd.s32 %s131, 1
    %p135 = scmp.eq.s32.totalorder %s13, 3
    %p136 = scmp.ne.s32.totalorder %s131, %s133
    %p137 = scmp.eq.s32.totalorder %s13, 0
    %p138 = por %p136, %p137
    %p139 = scmp.ne.s32.totalorder %s131, %s133
    %p140 = scmp.eq.s32.totalorder %s18, 3
    %p141 = por %p139, %p140
    %p142 = scmp.ne.s32.totalorder %s133, %s134
    %p143 = scmp.eq.s32.totalorder %s18, 0
    %p144 = por %p142, %p143
    %p145 = scmp.ne.s32.totalorder %s133, %s134
    %p146 = scmp.eq.s32.totalorder %s19, 3
    %p147 = por %p145, %p146
    %p149 = scmp.ne.s32.totalorder %s134, %s148
    %p150 = scmp.eq.s32.totalorder %s19, 0
    %p151 = por %p149, %p150
    %s153 = sadd.s32 %s152, 1
    %p156 = scmp.eq.s32.totalorder %s13, 3
    %p157 = scmp.ne.s32.totalorder %s152, %s154
    %p158 = scmp.eq.s32.totalorder %s13, 0
    %p159 = por %p157, %p158
    %p160 = scmp.ne.s32.totalorder %s152, %s154
    %p161 = scmp.eq.s32.totalorder %s18, 3
    %p162 = por %p160, %p161
    %p163 = scmp.ne.s32.totalorder %s154, %s155
    %p164 = scmp.eq.s32.totalorder %s18, 0
    %p165 = por %p163, %p164
    %p166 = scmp.ne.s32.totalorder %s154, %s155
    %p167 = scmp.eq.s32.totalorder %s19, 3
    %p168 = por %p166, %p167
    %p170 = scmp.ne.s32.totalorder %s155, %s169
    %p171 = scmp.eq.s32.totalorder %s19, 0
    %p172 = por %p170, %p171
    %s173 = ssub.s32 %s13, %s20
    %p174 = scmp.eq.s32.totalorder %s173, 0
    %s176 = sadd.s32 %s175, 1
    %s177 = scalar_select %p174, %s175, %s176
    %p180 = pneg %p174
    %p181 = scmp.eq.s32.totalorder %s13, 3
    %p182 = por %p180, %p181
    %p183 = scmp.ne.s32.totalorder %s175, %s178
    %p184 = scmp.eq.s32.totalorder %s13, 0
    %p185 = por %p183, %p184
    %p186 = scmp.ne.s32.totalorder %s175, %s178
    %p187 = scmp.eq.s32.totalorder %s18, 3
    %p188 = por %p186, %p187
    %p189 = scmp.ne.s32.totalorder %s178, %s179
    %p190 = scmp.eq.s32.totalorder %s18, 0
    %p191 = por %p189, %p190
    %p192 = scmp.ne.s32.totalorder %s178, %s179
    %p193 = scmp.eq.s32.totalorder %s19, 3
    %p194 = por %p192, %p193
    %p196 = scmp.ne.s32.totalorder %s179, %s195
    %p197 = scmp.eq.s32.totalorder %s19, 0
    %p198 = por %p196, %p197
    %p199 = scmp.le.s32.totalorder 1, %s13
    %p200 = scmp.lt.s32.totalorder %s13, 5
    %p201 = pnand %p199, %p200
    %p202 = pneg %p201
    // Predicated region
    $region9: #{tpu_custom_call.1} parent=5 // pred_check
      _
    $region10: #{tpu_custom_call.1} parent=5 // pred_check_branch
      %204 = sbr.rel (%p201) target = $region12
    $region11: #{tpu_custom_call.1} parent=5 // pred_region
      %s205 = ssub.s32 %s13, 1
      // Predicated region
      $region13: #{tpu_custom_call.1} parent=11 // pred_check
        %p206 = pneg %p60
      $region14: #{tpu_custom_call.1} parent=11 // pred_check_branch
        %208 = sbr.rel (%p206) target = $region16
      $region15: #{tpu_custom_call.1} parent=11 // pred_region
        _
      $region16: #{tpu_custom_call.1} parent=11 // pred_fallthru
        _
      // Predicated region
      $region17: #{tpu_custom_call.1} parent=11 // pred_check
        %p209 = pneg %p81
      $region18: #{tpu_custom_call.1} parent=11 // pred_check_branch
        %211 = sbr.rel (%p209) target = $region20
      $region19: #{tpu_custom_call.1} parent=11 // pred_region
        _
      $region20: #{tpu_custom_call.1} parent=11 // pred_fallthru
        _
      // Predicated region
      $region21: #{tpu_custom_call.1} parent=11 // pred_check
        %p212 = pneg %p102
      $region22: #{tpu_custom_call.1} parent=11 // pred_check_branch
        %214 = sbr.rel (%p212) target = $region24
      $region23: #{tpu_custom_call.1} parent=11 // pred_region
        _
      $region24: #{tpu_custom_call.1} parent=11 // pred_fallthru
        _
      // Predicated region
      $region25: #{tpu_custom_call.1} parent=11 // pred_check
        %p215 = pneg %p123
      $region26: #{tpu_custom_call.1} parent=11 // pred_check_branch
        %217 = sbr.rel (%p215) target = $region28
      $region27: #{tpu_custom_call.1} parent=11 // pred_region
        _
      $region28: #{tpu_custom_call.1} parent=11 // pred_fallthru
        _
      // Predicated region
      $region29: #{tpu_custom_call.1} parent=11 // pred_check
        %p218 = pneg %p144
      $region30: #{tpu_custom_call.1} parent=11 // pred_check_branch
        %220 = sbr.rel (%p218) target = $region32
      $region31: #{tpu_custom_call.1} parent=11 // pred_region
        _
      $region32: #{tpu_custom_call.1} parent=11 // pred_fallthru
        _
      // Predicated region
      $region33: #{tpu_custom_call.1} parent=11 // pred_check
        %p221 = pneg %p165
      $region34: #{tpu_custom_call.1} parent=11 // pred_check_branch
        %223 = sbr.rel (%p221) target = $region36
      $region35: #{tpu_custom_call.1} parent=11 // pred_region
        _
      $region36: #{tpu_custom_call.1} parent=11 // pred_fallthru
        _
    $region12: #{tpu_custom_call.1} parent=5 // pred_fallthru
      _
    %p224 = scmp.lt.s32.totalorder %s13, 4
    // Predicated region
    $region37: #{tpu_custom_call.1} parent=5 // pred_check
      %p225 = pneg %p224
    $region38: #{tpu_custom_call.1} parent=5 // pred_check_branch
      %227 = sbr.rel (%p225) target = $region40
    $region39: #{tpu_custom_call.1} parent=5 // pred_region
      // Predicated region
      $region41: #{tpu_custom_call.1} parent=39 // pred_check
        %p228 = pneg %p33
      $region42: #{tpu_custom_call.1} parent=39 // pred_check_branch
        %230 = sbr.rel (%p228) target = $region44
      $region43: #{tpu_custom_call.1} parent=39 // pred_region
        %s231 = smul.u32 2, %s13
        %p232 = scmp.lt.s32.totalorder %s231, 7
        %s233 = scalar_select %p232, %s231, 7
        %s234 = smul.addr %s233, 8
        %s235 = scalar_lea.vmem %s0, %s234
        %s236 = smul.u32 2, %s13
      $region44: #{tpu_custom_call.1} parent=39 // pred_fallthru
        _
    $region40: #{tpu_custom_call.1} parent=5 // pred_fallthru
      _
    %p237 = scmp.le.s32.totalorder 1, %s13
    %p238 = scmp.lt.s32.totalorder %s13, 5
    %p239 = pnand %p237, %p238
    %p240 = pneg %p239
    // Predicated region
    $region45: #{tpu_custom_call.1} parent=5 // pred_check
      _
    $region46: #{tpu_custom_call.1} parent=5 // pred_check_branch
      %242 = sbr.rel (%p239) target = $region48
    $region47: #{tpu_custom_call.1} parent=5 // pred_region
      %s243 = ssub.s32 %s13, 1
      %s244 = smul.u32 2, %s18
      %p245 = scmp.lt.s32.totalorder %s244, 7
      %s246 = scalar_select %p245, %s244, 7
      %s247 = smul.addr %s246, 8
      %s248 = scalar_lea.vmem %s0, %s247
      %p249 = pneg %p39
      %p250 = pneg %p36
      %p251 = pneg %p60
      %p252 = pneg %p57
      %p253 = pneg %p81
      %p254 = pneg %p78
      %p255 = pneg %p102
      %p256 = pneg %p99
      %p257 = pneg %p123
      %p258 = pneg %p120
      %p259 = pneg %p144
      %p260 = pneg %p141
      %p261 = pneg %p165
      %p262 = pneg %p162
      %p263 = pneg %p191
      %p264 = pneg %p188
      %s265 = smul.u32 2, %s18
      %p266 = scmp.lt.s32.totalorder %s265, 7
      %s267 = scalar_select %p266, %s265, 7
      %s268 = smul.addr %s267, 8
      %s269 = scalar_lea.vmem %s7, %s268
      %s270 = smul.u32 2, %s18
      %p271 = scmp.lt.s32.totalorder %s270, 7
      %s272 = scalar_select %p271, %s270, 7
      %s273 = smul.addr %s272, 8
      %s274 = scalar_lea.vmem %s0, %s273
      %s275 = smul.u32 2, %s18
      %s276 = smul.u32 2, %s18
      %p277 = scmp.lt.s32.totalorder %s276, 7
      %s278 = scalar_select %p277, %s276, 7
      %s279 = smul.addr %s278, 8
      %s280 = scalar_lea.vmem %s7, %s279
      %s281 = smul.u32 2, %s18
      %v282 = vld [vmem:[%s274] sm:$0xff]
      %v283 = vld [vmem:[%s274 + $0x8] sm:$0xff]
      %v284 = vld [vmem:[%s1] sm:$0xff]
      %v285 = vld [vmem:[%s1 + $0x8] sm:$0xff]
      %v286 = vld [vmem:[%s1 + $0x10] sm:$0xff]
      %v287 = vld [vmem:[%s1 + $0x18] sm:$0xff]
      %v288 = vld [vmem:[%s2] sm:$0x1]
      %v290 = vlaneseq
      %v291 = vshrl.u32 %v290, 7
      %v292 = vsub.s32 0, %v291
      %v293 = vrot.slane %v288, %v292
      %vm295 = vcmask 261120
      %v297 = vsel %vm295, %v282, 0
      %v300 = vsel %vm295, %v283, 0
      %302 = vmatprep.subr.mxu0 0.0
      %303 = vmatpush1.msra.mxu0 0.0
      %304 = vmatprep.subr.mxu0 0.0
      %305 = vmatpush1.msra.mxu0 0.0
      %306 = vmatprep.subr.mxu0 0.0
      %307 = vmatpush1.msra.mxu0 0.0
      %308 = vmatprep.subr.mxu0 0.0
      %309 = vmatpush1.msra.mxu0 0.0
      %310 = vmatprep.subr.mxu0 0.0
      %311 = vmatpush1.msra.mxu0 0.0
      %312 = vmatprep.subr.mxu0 0.0
      %313 = vmatpush1.msra.mxu0 0.0
      %314 = vmatprep.subr.mxu0 0.0
      %315 = vmatpush1.msra.mxu0 0.0
      %316 = vmatprep.subr.mxu0 0.0
      %317 = vmatpush1.msra.mxu0 0.0
      %318 = vmatprep.subr.mxu0 0.0
      %319 = vmatpush1.msra.mxu0 0.0
      %320 = vmatprep.subr.mxu0 0.0
      %321 = vmatpush1.msra.mxu0 0.0
      %322 = vmatprep.subr.mxu0 0.0
      %323 = vmatpush1.msra.mxu0 0.0
      %324 = vmatprep.subr.mxu0 0.0
      %325 = vmatpush1.msra.mxu0 0.0
      %326 = vmatprep.subr.mxu0 0.0
      %327 = vmatpush1.msra.mxu0 %v287
      %328 = vmatprep.subr.mxu0 0.0
      %329 = vmatpush1.msra.mxu0 %v286
      %330 = vmatprep.subr.mxu0 0.0
      %331 = vmatpush1.msra.mxu0 %v285
      %332 = vmatprep.subr.mxu0 0.0
      %333 = vmatpush1.msra.mxu0 %v284
      %334 = vmatprep.subr.mxu0 0.0
      %335 = vmatpush2.msra.mxu0 0.0
      %336 = vmatprep.subr.mxu0 0.0
      %337 = vmatpush2.msra.mxu0 0.0
      %338 = vmatprep.subr.mxu0 0.0
      %339 = vmatpush2.msra.mxu0 0.0
      %340 = vmatprep.subr.mxu0 0.0
      %341 = vmatpush2.msra.mxu0 0.0
      %342 = vmatprep.subr.mxu0 0.0
      %343 = vmatpush2.msra.mxu0 0.0
      %344 = vmatprep.subr.mxu0 0.0
      %345 = vmatpush2.msra.mxu0 0.0
      %346 = vmatprep.subr.mxu0 0.0
      %347 = vmatpush2.msra.mxu0 0.0
      %348 = vmatprep.subr.mxu0 0.0
      %349 = vmatpush2.msra.mxu0 0.0
      %350 = vmatprep.subr.mxu0 0.0
      %351 = vmatpush2.msra.mxu0 0.0
      %352 = vmatprep.subr.mxu0 0.0
      %353 = vmatpush2.msra.mxu0 0.0
      %354 = vmatprep.subr.mxu0 0.0
      %355 = vmatpush2.msra.mxu0 0.0
      %356 = vmatprep.subr.mxu0 0.0
      %357 = vmatpush2.msra.mxu0 0.0
      %358 = vmatprep.subr.mxu0 0.0
      %359 = vmatpush2.msra.mxu0 0.0
      %360 = vmatprep.subr.mxu0 0.0
      %361 = vmatpush2.msra.mxu0 0.0
      %362 = vmatprep.subr.mxu0 0.0
      %363 = vmatpush2.msra.mxu0 0.0
      %364 = vmatprep.subr.mxu0 0.0
      %365 = vmatpush2.msra.mxu0 0.0
      %366 = vmatprep.mubr.f32.mxu0 0.0
      %367 = vmatmul.mubr.f32.gmra.mxu0 %v297
      %v368 = vpop.f32.mrf.mxu0
      %v369 = vadd.f32 %v293, %v368
      %v370 = vpop.f32.mrf.mxu0
      %371 = vmatprep.mubr.f32.mxu0 0.0
      %372 = vmatmul.mubr.f32.gmra.mxu0 %v300
      %v373 = vpop.f32.mrf.mxu0
      %v374 = vadd.f32 %v293, %v373
      %v375 = vpop.f32.mrf.mxu0
      %376 = vdwg.mxu0
      %v377 = vmax.f32 %v369, 0.0
      %v378 = vmax.f32 %v374, 0.0
      %v379 = vld [vmem:[%s3] sm:$0xff]
      %v380 = vld [vmem:[%s3 + $0x8] sm:$0xff]
      %v381 = vld [vmem:[%s3 + $0x10] sm:$0xff]
      %v382 = vld [vmem:[%s3 + $0x18] sm:$0xff]
      %v383 = vld [vmem:[%s3 + $0x20] sm:$0xff]
      %v384 = vld [vmem:[%s3 + $0x28] sm:$0xff]
      %v385 = vld [vmem:[%s3 + $0x30] sm:$0xff]
      %v386 = vld [vmem:[%s3 + $0x38] sm:$0xff]
      %v387 = vld [vmem:[%s3 + $0x40] sm:$0xff]
      %v388 = vld [vmem:[%s3 + $0x48] sm:$0xff]
      %v389 = vld [vmem:[%s3 + $0x50] sm:$0xff]
      %v390 = vld [vmem:[%s3 + $0x58] sm:$0xff]
      %v391 = vld [vmem:[%s3 + $0x60] sm:$0xff]
      %v392 = vld [vmem:[%s3 + $0x68] sm:$0xff]
      %v393 = vld [vmem:[%s3 + $0x70] sm:$0xff]
      %v394 = vld [vmem:[%s3 + $0x78] sm:$0xff]
      %v395 = vld [vmem:[%s4] sm:$0x1]
      %v397 = vlaneseq
      %v398 = vshrl.u32 %v397, 7
      %v399 = vsub.s32 0, %v398
      %v400 = vrot.slane %v395, %v399
      %402 = vmatprep.subr.mxu0 0.0
      %403 = vmatpush1.msra.mxu0 %v394
      %404 = vmatprep.subr.mxu0 0.0
      %405 = vmatpush1.msra.mxu0 %v393
      %406 = vmatprep.subr.mxu0 0.0
      %407 = vmatpush1.msra.mxu0 %v392
      %408 = vmatprep.subr.mxu0 0.0
      %409 = vmatpush1.msra.mxu0 %v391
      %410 = vmatprep.subr.mxu0 0.0
      %411 = vmatpush1.msra.mxu0 %v390
      %412 = vmatprep.subr.mxu0 0.0
      %413 = vmatpush1.msra.mxu0 %v389
      %414 = vmatprep.subr.mxu0 0.0
      %415 = vmatpush1.msra.mxu0 %v388
      %416 = vmatprep.subr.mxu0 0.0
      %417 = vmatpush1.msra.mxu0 %v387
      %418 = vmatprep.subr.mxu0 0.0
      %419 = vmatpush1.msra.mxu0 %v386
      %420 = vmatprep.subr.mxu0 0.0
      %421 = vmatpush1.msra.mxu0 %v385
      %422 = vmatprep.subr.mxu0 0.0
      %423 = vmatpush1.msra.mxu0 %v384
      %424 = vmatprep.subr.mxu0 0.0
      %425 = vmatpush1.msra.mxu0 %v383
      %426 = vmatprep.subr.mxu0 0.0
      %427 = vmatpush1.msra.mxu0 %v382
      %428 = vmatprep.subr.mxu0 0.0
      %429 = vmatpush1.msra.mxu0 %v381
      %430 = vmatprep.subr.mxu0 0.0
      %431 = vmatpush1.msra.mxu0 %v380
      %432 = vmatprep.subr.mxu0 0.0
      %433 = vmatpush1.msra.mxu0 %v379
      %434 = vmatprep.subr.mxu0 0.0
      %435 = vmatpush2.msra.mxu0 0.0
      %436 = vmatprep.subr.mxu0 0.0
      %437 = vmatpush2.msra.mxu0 0.0
      %438 = vmatprep.subr.mxu0 0.0
      %439 = vmatpush2.msra.mxu0 0.0
      %440 = vmatprep.subr.mxu0 0.0
      %441 = vmatpush2.msra.mxu0 0.0
      %442 = vmatprep.subr.mxu0 0.0
      %443 = vmatpush2.msra.mxu0 0.0
      %444 = vmatprep.subr.mxu0 0.0
      %445 = vmatpush2.msra.mxu0 0.0
      %446 = vmatprep.subr.mxu0 0.0
      %447 = vmatpush2.msra.mxu0 0.0
      %448 = vmatprep.subr.mxu0 0.0
      %449 = vmatpush2.msra.mxu0 0.0
      %450 = vmatprep.subr.mxu0 0.0
      %451 = vmatpush2.msra.mxu0 0.0
      %452 = vmatprep.subr.mxu0 0.0
      %453 = vmatpush2.msra.mxu0 0.0
      %454 = vmatprep.subr.mxu0 0.0
      %455 = vmatpush2.msra.mxu0 0.0
      %456 = vmatprep.subr.mxu0 0.0
      %457 = vmatpush2.msra.mxu0 0.0
      %458 = vmatprep.subr.mxu0 0.0
      %459 = vmatpush2.msra.mxu0 0.0
      %460 = vmatprep.subr.mxu0 0.0
      %461 = vmatpush2.msra.mxu0 0.0
      %462 = vmatprep.subr.mxu0 0.0
      %463 = vmatpush2.msra.mxu0 0.0
      %464 = vmatprep.subr.mxu0 0.0
      %465 = vmatpush2.msra.mxu0 0.0
      %466 = vmatprep.mubr.f32.mxu0 0.0
      %467 = vmatmul.mubr.f32.gmra.mxu0 %v377
      %v468 = vpop.f32.mrf.mxu0
      %v469 = vadd.f32 %v400, %v468
      %v470 = vpop.f32.mrf.mxu0
      %471 = vmatprep.mubr.f32.mxu0 0.0
      %472 = vmatmul.mubr.f32.gmra.mxu0 %v378
      %v473 = vpop.f32.mrf.mxu0
      %v474 = vadd.f32 %v400, %v473
      %v475 = vpop.f32.mrf.mxu0
      %476 = vdwg.mxu0
      %v477 = vmax.f32 %v469, 0.0
      %v478 = vmax.f32 %v474, 0.0
      %v479 = vld [vmem:[%s5] sm:$0xff]
      %v480 = vld [vmem:[%s5 + $0x8] sm:$0xff]
      %v481 = vld [vmem:[%s5 + $0x10] sm:$0xff]
      %v482 = vld [vmem:[%s5 + $0x18] sm:$0xff]
      %v483 = vld [vmem:[%s5 + $0x20] sm:$0xff]
      %v484 = vld [vmem:[%s5 + $0x28] sm:$0xff]
      %v485 = vld [vmem:[%s5 + $0x30] sm:$0xff]
      %v486 = vld [vmem:[%s5 + $0x38] sm:$0xff]
      %v487 = vld [vmem:[%s5 + $0x40] sm:$0xff]
      %v488 = vld [vmem:[%s5 + $0x48] sm:$0xff]
      %v489 = vld [vmem:[%s5 + $0x50] sm:$0xff]
      %v490 = vld [vmem:[%s5 + $0x58] sm:$0xff]
      %v491 = vld [vmem:[%s5 + $0x60] sm:$0xff]
      %v492 = vld [vmem:[%s5 + $0x68] sm:$0xff]
      %v493 = vld [vmem:[%s5 + $0x70] sm:$0xff]
      %v494 = vld [vmem:[%s5 + $0x78] sm:$0xff]
      %v495 = vld [vmem:[%s6] sm:$0x1]
      %v497 = vlaneseq
      %v498 = vshrl.u32 %v497, 7
      %v499 = vsub.s32 0, %v498
      %v500 = vrot.slane %v495, %v499
      %502 = vmatprep.subr.mxu0 0.0
      %503 = vmatpush1.msra.mxu0 %v494
      %504 = vmatprep.subr.mxu0 0.0
      %505 = vmatpush1.msra.mxu0 %v493
      %506 = vmatprep.subr.mxu0 0.0
      %507 = vmatpush1.msra.mxu0 %v492
      %508 = vmatprep.subr.mxu0 0.0
      %509 = vmatpush1.msra.mxu0 %v491
      %510 = vmatprep.subr.mxu0 0.0
      %511 = vmatpush1.msra.mxu0 %v490
      %512 = vmatprep.subr.mxu0 0.0
      %513 = vmatpush1.msra.mxu0 %v489
      %514 = vmatprep.subr.mxu0 0.0
      %515 = vmatpush1.msra.mxu0 %v488
      %516 = vmatprep.subr.mxu0 0.0
      %517 = vmatpush1.msra.mxu0 %v487
      %518 = vmatprep.subr.mxu0 0.0
      %519 = vmatpush1.msra.mxu0 %v486
      %520 = vmatprep.subr.mxu0 0.0
      %521 = vmatpush1.msra.mxu0 %v485
      %522 = vmatprep.subr.mxu0 0.0
      %523 = vmatpush1.msra.mxu0 %v484
      %524 = vmatprep.subr.mxu0 0.0
      %525 = vmatpush1.msra.mxu0 %v483
      %526 = vmatprep.subr.mxu0 0.0
      %527 = vmatpush1.msra.mxu0 %v482
      %528 = vmatprep.subr.mxu0 0.0
      %529 = vmatpush1.msra.mxu0 %v481
      %530 = vmatprep.subr.mxu0 0.0
      %531 = vmatpush1.msra.mxu0 %v480
      %532 = vmatprep.subr.mxu0 0.0
      %533 = vmatpush1.msra.mxu0 %v479
      %534 = vmatprep.subr.mxu0 0.0
      %535 = vmatpush2.msra.mxu0 0.0
      %536 = vmatprep.subr.mxu0 0.0
      %537 = vmatpush2.msra.mxu0 0.0
      %538 = vmatprep.subr.mxu0 0.0
      %539 = vmatpush2.msra.mxu0 0.0
      %540 = vmatprep.subr.mxu0 0.0
      %541 = vmatpush2.msra.mxu0 0.0
      %542 = vmatprep.subr.mxu0 0.0
      %543 = vmatpush2.msra.mxu0 0.0
      %544 = vmatprep.subr.mxu0 0.0
      %545 = vmatpush2.msra.mxu0 0.0
      %546 = vmatprep.subr.mxu0 0.0
      %547 = vmatpush2.msra.mxu0 0.0
      %548 = vmatprep.subr.mxu0 0.0
      %549 = vmatpush2.msra.mxu0 0.0
      %550 = vmatprep.subr.mxu0 0.0
      %551 = vmatpush2.msra.mxu0 0.0
      %552 = vmatprep.subr.mxu0 0.0
      %553 = vmatpush2.msra.mxu0 0.0
      %554 = vmatprep.subr.mxu0 0.0
      %555 = vmatpush2.msra.mxu0 0.0
      %556 = vmatprep.subr.mxu0 0.0
      %557 = vmatpush2.msra.mxu0 0.0
      %558 = vmatprep.subr.mxu0 0.0
      %559 = vmatpush2.msra.mxu0 0.0
      %560 = vmatprep.subr.mxu0 0.0
      %561 = vmatpush2.msra.mxu0 0.0
      %562 = vmatprep.subr.mxu0 0.0
      %563 = vmatpush2.msra.mxu0 0.0
      %564 = vmatprep.subr.mxu0 0.0
      %565 = vmatpush2.msra.mxu0 0.0
      %566 = vmatprep.mubr.f32.mxu0 0.0
      %567 = vmatmul.mubr.f32.gmra.mxu0 %v477
      %v568 = vpop.f32.mrf.mxu0
      %v569 = vadd.f32 %v500, %v568
      %v570 = vpop.f32.mrf.mxu0
      %571 = vmatprep.mubr.f32.mxu0 0.0
      %572 = vmatmul.mubr.f32.gmra.mxu0 %v478
      %v573 = vpop.f32.mrf.mxu0
      %v574 = vadd.f32 %v500, %v573
      %v575 = vpop.f32.mrf.mxu0
      %576 = vdwg.mxu0
      %vm577 = vcmask 130048
      %578 = vst.msk [vmem:[%s280] sm:$0xff] %vm577, %v569
      %579 = vst.msk [vmem:[%s280 + $0x8] sm:$0xff] %vm577, %v574
      %s580 = smul.u32 2, %s18
      %p581 = scmp.lt.s32.totalorder %s580, 7
      %s582 = scalar_select %p581, %s580, 7
      %s583 = smul.addr %s582, 8
      %s584 = scalar_lea.vmem %s7, %s583
      // Predicated region
      $region49: #{tpu_custom_call.1} parent=47 // pred_check
        %p585 = pneg %p188
      $region50: #{tpu_custom_call.1} parent=47 // pred_check_branch
        %587 = sbr.rel (%p585) target = $region52
      $region51: #{tpu_custom_call.1} parent=47 // pred_region
        %s588 = smul.u32 2, %s18
      $region52: #{tpu_custom_call.1} parent=47 // pred_fallthru
        _
    $region48: #{tpu_custom_call.1} parent=5 // pred_fallthru
      _
    %p589 = scmp.le.s32.totalorder 2, %s13
    // Predicated region
    $region53: #{tpu_custom_call.1} parent=5 // pred_check
      %p590 = pneg %p589
    $region54: #{tpu_custom_call.1} parent=5 // pred_check_branch
      %592 = sbr.rel (%p590) target = $region56
    $region55: #{tpu_custom_call.1} parent=5 // pred_region
      %s593 = ssub.s32 %s13, 2
      // Predicated region
      $region57: #{tpu_custom_call.1} parent=55 // pred_check
        %p594 = pneg %p194
      $region58: #{tpu_custom_call.1} parent=55 // pred_check_branch
        %596 = sbr.rel (%p594) target = $region60
      $region59: #{tpu_custom_call.1} parent=55 // pred_region
        %s597 = smul.u32 2, %s19
        %p598 = scmp.lt.s32.totalorder %s597, 7
        %s599 = scalar_select %p598, %s597, 7
        %s600 = smul.addr %s599, 8
        %s601 = scalar_lea.vmem %s7, %s600
      $region60: #{tpu_custom_call.1} parent=55 // pred_fallthru
        _
    $region56: #{tpu_custom_call.1} parent=5 // pred_fallthru
      _
  $region6: #{tpu_custom_call.1} parent=0 // loop_footer
    %s17 = sadd.s32 1, %s13
  $region7: #{tpu_custom_call.1} parent=0 // loop_footer_branch
    %12 = sbr.rel target = $region3
  $region8: #{tpu_custom_call.1} parent=0 // loop_exit
    _

</llo_original>
